<compile_context>
chip_gen: v5e
topology: v5e:2x2
jax: 0.10.0
libtpu: 0.0.40
codegen_flags: <defaults>
</compile_context>

<pallas_src>
import jax
import jax.numpy as jnp
from jax.experimental import pallas as pl
from jax.experimental.pallas import tpu as pltpu


def _round_up(x, m):
    return ((x + m - 1) // m) * m


def _pad2d(x, rows, cols):
    pr, pc = rows - x.shape[0], cols - x.shape[1]
    if pr == 0 and pc == 0:
        return x
    return jnp.pad(x, ((0, pr), (0, pc)))


def _complex_linear_kernel(xr_ref, xi_ref, wr_ref, wi_ref, bd_ref, bs_ref,
                           or_ref, oi_ref, a1_ref, a2_ref, a3_ref):
    k = pl.program_id(2)

    @pl.when(k == 0)
    def _():
        a1_ref[...] = jnp.zeros_like(a1_ref)
        a2_ref[...] = jnp.zeros_like(a2_ref)
        a3_ref[...] = jnp.zeros_like(a3_ref)

    xr = xr_ref[...]
    xi = xi_ref[...]
    wr = wr_ref[...]
    wi = wi_ref[...]

    # Gauss sums computed in-kernel: one (tm,tk) + one (tk,tn) VPU add per step,
    # co-issued with MXU work -> no third weight stream from HBM.
    xs = xr + xi
    ws = wr + wi

    # Bare `acc += dot` accumulation (in-place MRB accumulate on v7x, fewer
    # VPU/VMEM passes everywhere).
    a1_ref[...] += jnp.dot(xr, wr, preferred_element_type=jnp.float32)
    a2_ref[...] += jnp.dot(xi, wi, preferred_element_type=jnp.float32)
    a3_ref[...] += jnp.dot(xs, ws, preferred_element_type=jnp.float32)

    @pl.when(k == pl.num_programs(2) - 1)
    def _():
        a1 = a1_ref[...]
        a2 = a2_ref[...]
        # out_r = xr@Wr - xi@Wi + (b_r - b_i)
        or_ref[...] = (a1 - a2 + bd_ref[...]).astype(or_ref.dtype)
        # out_i = (xr+xi)@(Wr+Wi) - xr@Wr - xi@Wi + (b_r + b_i)
        oi_ref[...] = (a3_ref[...] - a1 - a2 + bs_ref[...]).astype(oi_ref.dtype)


def pack_complex_linear_params(w_r, w_i, b_r, b_i, *, tn=512, tk=512,
                               mxu_dtype=jnp.bfloat16):
    """One-time parameter packing (do this at model-setup time, not per call).

    w_r, w_i : (out_features, in_features)  -- PyTorch fc.weight layout
    b_r, b_i : (out_features,)
    """
    N, K = w_r.shape
    assert w_i.shape == (N, K) and b_r.shape == (N,) and b_i.shape == (N,)

    tk = min(tk, _round_up(K, 128))
    tn = min(tn, _round_up(N, 128))
    Kp, Np = _round_up(K, tk), _round_up(N, tn)

    wr_t = _pad2d(w_r.T.astype(mxu_dtype), Kp, Np)   # (in, out), bf16, padded
    wi_t = _pad2d(w_i.T.astype(mxu_dtype), Kp, Np)
    bd = _pad2d((b_r.astype(jnp.float32) - b_i.astype(jnp.float32)).reshape(1, N), 1, Np)
    bs = _pad2d((b_r.astype(jnp.float32) + b_i.astype(jnp.float32)).reshape(1, N), 1, Np)

    return dict(wr=wr_t, wi=wi_t, bd=bd, bs=bs,
                in_features=K, out_features=N, tk=tk, tn=tn,
                mxu_dtype=mxu_dtype)


def complex_linear(params, x_r, x_i, *, tm=None, out_dtype=None):
    """ComplexLinear forward.  x_r, x_i : (B, in_features)."""
    B, K = x_r.shape
    assert K == params["in_features"] and x_i.shape == (B, K)
    N = params["out_features"]
    tk, tn = params["tk"], params["tn"]
    mxu_dtype = params["mxu_dtype"]
    out_dtype = out_dtype or x_r.dtype
    Kp, Np = params["wr"].shape

    # tm >= B whenever possible so the weight set is streamed from HBM exactly
    # once (weight traffic = ceil(Mp/tm) * 2 streams * K*N*2B); cap so the
    # double-buffered working set stays well inside v7x's 64 MiB VMEM.
    if tm is None:
        tm = min(_round_up(B, 16), 1024)
    else:
        tm = min(tm, _round_up(B, 16))
    Mp = _round_up(B, tm)

    # Only activation-side prep remains on the per-call path.
    xr = _pad2d(x_r.astype(mxu_dtype), Mp, Kp)
    xi = _pad2d(x_i.astype(mxu_dtype), Mp, Kp)

    grid = (Mp // tm, Np // tn, Kp // tk)

    x_spec = pl.BlockSpec((tm, tk), lambda i, j, k: (i, k))
    # Weight tiles do not depend on the batch index -> reused across M tiles.
    w_spec = pl.BlockSpec((tk, tn), lambda i, j, k: (k, j))
    b_spec = pl.BlockSpec((1, tn), lambda i, j, k: (0, j))
    o_spec = pl.BlockSpec((tm, tn), lambda i, j, k: (i, j))

    out_r, out_i = pl.pallas_call(
        _complex_linear_kernel,
        out_shape=(jax.ShapeDtypeStruct((Mp, Np), out_dtype),
                   jax.ShapeDtypeStruct((Mp, Np), out_dtype)),
        grid_spec=pltpu.PrefetchScalarGridSpec(
            num_scalar_prefetch=0,
            grid=grid,
            in_specs=[x_spec, x_spec, w_spec, w_spec, b_spec, b_spec],
            out_specs=[o_spec, o_spec],
            scratch_shapes=[pltpu.VMEM((tm, tn), jnp.float32),
                            pltpu.VMEM((tm, tn), jnp.float32),
                            pltpu.VMEM((tm, tn), jnp.float32)],
        ),
        compiler_params=pltpu.CompilerParams(
            dimension_semantics=("parallel", "parallel", "arbitrary"),
            # 48 MiB: above the 32 MiB scoped default on v5e/v6e, still safe on
            # v7x's 64 MiB physical VMEM per TensorCore.
            vmem_limit_bytes=48 * 1024 * 1024,
        ),
    )(xr, xi, params["wr"], params["wi"], params["bd"], params["bs"])

    return out_r[:B, :N], out_i[:B, :N]


if __name__ == "__main__":
    key = jax.random.PRNGKey(0)
    # Small shapes; tn=tk=256 chosen so the grid still exercises the N-parallel
    # axis and the K reduction (grid = (1, 2, 2)).
    B, in_features, out_features = 96, 512, 384

    k = jax.random.split(key, 6)
    bound = 1.0 / (in_features ** 0.5)              # PyTorch Linear init range
    x_r = jax.random.normal(k[0], (B, in_features), dtype=jnp.float32)
    x_i = jax.random.normal(k[1], (B, in_features), dtype=jnp.float32)
    w_r = jax.random.uniform(k[2], (out_features, in_features), jnp.float32, -bound, bound)
    w_i = jax.random.uniform(k[3], (out_features, in_features), jnp.float32, -bound, bound)
    b_r = jax.random.uniform(k[4], (out_features,), jnp.float32, -bound, bound)
    b_i = jax.random.uniform(k[5], (out_features,), jnp.float32, -bound, bound)

    # One-time parameter packing (hoisted weight-side prep).
    params = pack_complex_linear_params(w_r, w_i, b_r, b_i, tn=256, tk=256)

    out_r, out_i = complex_linear(params, x_r, x_i)
    jax.block_until_ready((out_r, out_i))

    # Pure-JAX f32 reference of the PyTorch forward.
    fc_r = lambda x: x @ w_r.T + b_r
    fc_i = lambda x: x @ w_i.T + b_i
    ref_r = fc_r(x_r) - fc_i(x_i)
    ref_i = fc_r(x_i) + fc_i(x_r)

    # bf16 MXU inputs + Gauss recombination -> loosened tolerance vs pure f32.
    err_r = float(jnp.max(jnp.abs(out_r - ref_r)))
    err_i = float(jnp.max(jnp.abs(out_i - ref_i)))
    assert jnp.allclose(out_r, ref_r, atol=3e-2, rtol=3e-2), err_r
    assert jnp.allclose(out_i, ref_i, atol=3e-2, rtol=3e-2), err_i
    print("KERNEL_OK")
</pallas_src>

<mosaic_0001>
module attributes {stable_mosaic.version = 11 : i64} {
  func.func @_complex_linear_kernel(%arg0: i32, %arg1: i32, %arg2: i32, %arg3: memref<96x256xbf16, #tpu.memory_space<vmem>>, %arg4: memref<96x256xbf16, #tpu.memory_space<vmem>>, %arg5: memref<256x256xbf16, #tpu.memory_space<vmem>>, %arg6: memref<256x256xbf16, #tpu.memory_space<vmem>>, %arg7: memref<1x256xf32, #tpu.memory_space<vmem>>, %arg8: memref<1x256xf32, #tpu.memory_space<vmem>>, %arg9: memref<96x256xf32, #tpu.memory_space<vmem>>, %arg10: memref<96x256xf32, #tpu.memory_space<vmem>>, %arg11: memref<96x256xf32, #tpu.memory_space<vmem>>, %arg12: memref<96x256xf32, #tpu.memory_space<vmem>>, %arg13: memref<96x256xf32, #tpu.memory_space<vmem>>) attributes {dimension_semantics = [#tpu.dimension_semantics<parallel>, #tpu.dimension_semantics<parallel>, #tpu.dimension_semantics<arbitrary>], iteration_bounds = array<i64: 1, 2, 2>, scalar_prefetch = 0 : i64, scratch_operands = 3 : i64, tpu.core_type = #tpu.core_type<tc>, window_params = [{transform_indices = @transform_0, window_bounds = array<i64: 96, 256>}, {transform_indices = @transform_1, window_bounds = array<i64: 96, 256>}, {transform_indices = @transform_2, window_bounds = array<i64: 256, 256>}, {transform_indices = @transform_3, window_bounds = array<i64: 256, 256>}, {transform_indices = @transform_4, window_bounds = array<i64: 1, 256>}, {transform_indices = @transform_5, window_bounds = array<i64: 1, 256>}, {transform_indices = @transform_6, window_bounds = array<i64: 96, 256>}, {transform_indices = @transform_7, window_bounds = array<i64: 96, 256>}]} {
    %c0_i32 = arith.constant 0 : i32
    %0 = arith.cmpi eq, %arg2, %c0_i32 : i32
    %1 = arith.extui %0 : i1 to i32
    %c0_i32_0 = arith.constant 0 : i32
    %2 = arith.cmpi ne, %1, %c0_i32_0 : i32
    scf.if %2 {
      %cst_23 = arith.constant 0.000000e+00 : f32
      %24 = vector.broadcast %cst_23 : f32 to vector<96x256xf32>
      %c0_24 = arith.constant 0 : index
      %c0_25 = arith.constant 0 : index
      %25 = vector.load %arg11[%c0_24, %c0_25] : memref<96x256xf32, #tpu.memory_space<vmem>>, vector<96x256xf32>
      tpu.vector_store %arg11[%c0_24, %c0_25], %24 {strides = array<i32>} : memref<96x256xf32, #tpu.memory_space<vmem>>, vector<96x256xf32>,
      %cst_26 = arith.constant 0.000000e+00 : f32
      %26 = vector.broadcast %cst_26 : f32 to vector<96x256xf32>
      %c0_27 = arith.constant 0 : index
      %c0_28 = arith.constant 0 : index
      %27 = vector.load %arg12[%c0_27, %c0_28] : memref<96x256xf32, #tpu.memory_space<vmem>>, vector<96x256xf32>
      tpu.vector_store %arg12[%c0_27, %c0_28], %26 {strides = array<i32>} : memref<96x256xf32, #tpu.memory_space<vmem>>, vector<96x256xf32>,
      %cst_29 = arith.constant 0.000000e+00 : f32
      %28 = vector.broadcast %cst_29 : f32 to vector<96x256xf32>
      %c0_30 = arith.constant 0 : index
      %c0_31 = arith.constant 0 : index
      %29 = vector.load %arg13[%c0_30, %c0_31] : memref<96x256xf32, #tpu.memory_space<vmem>>, vector<96x256xf32>
      tpu.vector_store %arg13[%c0_30, %c0_31], %28 {strides = array<i32>} : memref<96x256xf32, #tpu.memory_space<vmem>>, vector<96x256xf32>,
    } else {
    }
    %c0 = arith.constant 0 : index
    %c0_1 = arith.constant 0 : index
    %3 = vector.load %arg3[%c0, %c0_1] : memref<96x256xbf16, #tpu.memory_space<vmem>>, vector<96x256xbf16>
    %c0_2 = arith.constant 0 : index
    %c0_3 = arith.constant 0 : index
    %4 = vector.load %arg4[%c0_2, %c0_3] : memref<96x256xbf16, #tpu.memory_space<vmem>>, vector<96x256xbf16>
    %c0_4 = arith.constant 0 : index
    %c0_5 = arith.constant 0 : index
    %5 = vector.load %arg5[%c0_4, %c0_5] : memref<256x256xbf16, #tpu.memory_space<vmem>>, vector<256x256xbf16>
    %c0_6 = arith.constant 0 : index
    %c0_7 = arith.constant 0 : index
    %6 = vector.load %arg6[%c0_6, %c0_7] : memref<256x256xbf16, #tpu.memory_space<vmem>>, vector<256x256xbf16>
    %7 = arith.addf %3, %4 : vector<96x256xbf16>
    %8 = arith.addf %5, %6 : vector<256x256xbf16>
    %c0_8 = arith.constant 0 : index
    %c0_9 = arith.constant 0 : index
    %9 = vector.load %arg11[%c0_8, %c0_9] : memref<96x256xf32, #tpu.memory_space<vmem>>, vector<96x256xf32>
    %cst = arith.constant dense<0.000000e+00> : vector<96x256xf32>
    %10 = tpu.matmul %3, %5, %cst {dimension_numbers = #tpu.dot_dimension_numbers<[1], [0], [0], [1], [0, 0, 1, 1], [], []>} : vector<96x256xbf16>, vector<256x256xbf16>, vector<96x256xf32> -> vector<96x256xf32>
    %11 = arith.addf %9, %10 : vector<96x256xf32>
    %c0_10 = arith.constant 0 : index
    %c0_11 = arith.constant 0 : index
    %12 = vector.load %arg11[%c0_10, %c0_11] : memref<96x256xf32, #tpu.memory_space<vmem>>, vector<96x256xf32>
    tpu.vector_store %arg11[%c0_10, %c0_11], %11 {strides = array<i32>} : memref<96x256xf32, #tpu.memory_space<vmem>>, vector<96x256xf32>,
    %c0_12 = arith.constant 0 : index
    %c0_13 = arith.constant 0 : index
    %13 = vector.load %arg12[%c0_12, %c0_13] : memref<96x256xf32, #tpu.memory_space<vmem>>, vector<96x256xf32>
    %cst_14 = arith.constant dense<0.000000e+00> : vector<96x256xf32>
    %14 = tpu.matmul %4, %6, %cst_14 {dimension_numbers = #tpu.dot_dimension_numbers<[1], [0], [0], [1], [0, 0, 1, 1], [], []>} : vector<96x256xbf16>, vector<256x256xbf16>, vector<96x256xf32> -> vector<96x256xf32>
    %15 = arith.addf %13, %14 : vector<96x256xf32>
    %c0_15 = arith.constant 0 : index
    %c0_16 = arith.constant 0 : index
    %16 = vector.load %arg12[%c0_15, %c0_16] : memref<96x256xf32, #tpu.memory_space<vmem>>, vector<96x256xf32>
    tpu.vector_store %arg12[%c0_15, %c0_16], %15 {strides = array<i32>} : memref<96x256xf32, #tpu.memory_space<vmem>>, vector<96x256xf32>,
    %c0_17 = arith.constant 0 : index
    %c0_18 = arith.constant 0 : index
    %17 = vector.load %arg13[%c0_17, %c0_18] : memref<96x256xf32, #tpu.memory_space<vmem>>, vector<96x256xf32>
    %cst_19 = arith.constant dense<0.000000e+00> : vector<96x256xf32>
    %18 = tpu.matmul %7, %8, %cst_19 {dimension_numbers = #tpu.dot_dimension_numbers<[1], [0], [0], [1], [0, 0, 1, 1], [], []>} : vector<96x256xbf16>, vector<256x256xbf16>, vector<96x256xf32> -> vector<96x256xf32>
    %19 = arith.addf %17, %18 : vector<96x256xf32>
    %c0_20 = arith.constant 0 : index
    %c0_21 = arith.constant 0 : index
    %20 = vector.load %arg13[%c0_20, %c0_21] : memref<96x256xf32, #tpu.memory_space<vmem>>, vector<96x256xf32>
    tpu.vector_store %arg13[%c0_20, %c0_21], %19 {strides = array<i32>} : memref<96x256xf32, #tpu.memory_space<vmem>>, vector<96x256xf32>,
    %c1_i32 = arith.constant 1 : i32
    %21 = arith.cmpi eq, %arg2, %c1_i32 : i32
    %22 = arith.extui %21 : i1 to i32
    %c0_i32_22 = arith.constant 0 : i32
    %23 = arith.cmpi ne, %22, %c0_i32_22 : i32
    scf.if %23 {
      %c0_23 = arith.constant 0 : index
      %c0_24 = arith.constant 0 : index
      %24 = vector.load %arg11[%c0_23, %c0_24] : memref<96x256xf32, #tpu.memory_space<vmem>>, vector<96x256xf32>
      %c0_25 = arith.constant 0 : index
      %c0_26 = arith.constant 0 : index
      %25 = vector.load %arg12[%c0_25, %c0_26] : memref<96x256xf32, #tpu.memory_space<vmem>>, vector<96x256xf32>
      %26 = arith.subf %24, %25 : vector<96x256xf32>
      %c0_27 = arith.constant 0 : index
      %c0_28 = arith.constant 0 : index
      %27 = vector.load %arg7[%c0_27, %c0_28] : memref<1x256xf32, #tpu.memory_space<vmem>>, vector<1x256xf32>
      %28 = vector.broadcast %27 : vector<1x256xf32> to vector<96x256xf32>
      %29 = arith.addf %26, %28 : vector<96x256xf32>
      %c0_29 = arith.constant 0 : index
      %c0_30 = arith.constant 0 : index
      %30 = vector.load %arg9[%c0_29, %c0_30] : memref<96x256xf32, #tpu.memory_space<vmem>>, vector<96x256xf32>
      tpu.vector_store %arg9[%c0_29, %c0_30], %29 {strides = array<i32>} : memref<96x256xf32, #tpu.memory_space<vmem>>, vector<96x256xf32>,
      %c0_31 = arith.constant 0 : index
      %c0_32 = arith.constant 0 : index
      %31 = vector.load %arg13[%c0_31, %c0_32] : memref<96x256xf32, #tpu.memory_space<vmem>>, vector<96x256xf32>
      %32 = arith.subf %31, %24 : vector<96x256xf32>
      %33 = arith.subf %32, %25 : vector<96x256xf32>
      %c0_33 = arith.constant 0 : index
      %c0_34 = arith.constant 0 : index
      %34 = vector.load %arg8[%c0_33, %c0_34] : memref<1x256xf32, #tpu.memory_space<vmem>>, vector<1x256xf32>
      %35 = vector.broadcast %34 : vector<1x256xf32> to vector<96x256xf32>
      %36 = arith.addf %33, %35 : vector<96x256xf32>
      %c0_35 = arith.constant 0 : index
      %c0_36 = arith.constant 0 : index
      %37 = vector.load %arg10[%c0_35, %c0_36] : memref<96x256xf32, #tpu.memory_space<vmem>>, vector<96x256xf32>
      tpu.vector_store %arg10[%c0_35, %c0_36], %36 {strides = array<i32>} : memref<96x256xf32, #tpu.memory_space<vmem>>, vector<96x256xf32>,
    } else {
    }
    return
  }
  func.func @transform_0(%arg0: i32, %arg1: i32, %arg2: i32) -> (i32, i32) {
    %c0_i32 = arith.constant 0 : i32
    return %arg0, %arg2 : i32, i32
  }
  func.func @transform_1(%arg0: i32, %arg1: i32, %arg2: i32) -> (i32, i32) {
    %c0_i32 = arith.constant 0 : i32
    return %arg0, %arg2 : i32, i32
  }
  func.func @transform_2(%arg0: i32, %arg1: i32, %arg2: i32) -> (i32, i32) {
    %c0_i32 = arith.constant 0 : i32
    return %arg2, %arg1 : i32, i32
  }
  func.func @transform_3(%arg0: i32, %arg1: i32, %arg2: i32) -> (i32, i32) {
    %c0_i32 = arith.constant 0 : i32
    return %arg2, %arg1 : i32, i32
  }
  func.func @transform_4(%arg0: i32, %arg1: i32, %arg2: i32) -> (i32, i32) {
    %c0_i32 = arith.constant 0 : i32
    %c0_i32_0 = arith.constant 0 : i32
    return %c0_i32, %arg1 : i32, i32
  }
  func.func @transform_5(%arg0: i32, %arg1: i32, %arg2: i32) -> (i32, i32) {
    %c0_i32 = arith.constant 0 : i32
    %c0_i32_0 = arith.constant 0 : i32
    return %c0_i32, %arg1 : i32, i32
  }
  func.func @transform_6(%arg0: i32, %arg1: i32, %arg2: i32) -> (i32, i32) {
    %c0_i32 = arith.constant 0 : i32
    return %arg0, %arg1 : i32, i32
  }
  func.func @transform_7(%arg0: i32, %arg1: i32, %arg2: i32) -> (i32, i32) {
    %c0_i32 = arith.constant 0 : i32
    return %arg0, %arg1 : i32, i32
  }
}

</mosaic_0001>

<llo_original>
// kernel: tpu_custom_call.1
$region0: #{tpu_custom_call.1}
  #allocation0 [shape = 'u32[]', space=smem, size = 0x4, offset = 0x4, fixed_abs, tag = 'smem constant byte address 0x4 - core index']
  #allocation1 [shape = 'u32[72,128]{1,0:T(1,128)}', space=vmem, size = 0x9000, scoped, tag = 'internal scratch']
  #allocation2 [shape = 'f32[96,256]{1,0:T(8,128)}', space=vmem, size = 0x18000, scoped, tag = 'scratch operand']
  #allocation3 [shape = 'f32[96,256]{1,0:T(8,128)}', space=vmem, size = 0x18000, scoped, tag = 'scratch operand']
  #allocation4 [shape = 'f32[96,256]{1,0:T(8,128)}', space=vmem, size = 0x18000, scoped, tag = 'scratch operand']
  %s0 = inlined_call_operand.hbm [shape: bf16[96,512], index: 0, kind: input, shape index: {}]
  %s1 = inlined_call_operand.hbm [shape: bf16[96,512], index: 1, kind: input, shape index: {}]
  %s2 = inlined_call_operand.hbm [shape: bf16[512,512], index: 2, kind: input, shape index: {}]
  %s3 = inlined_call_operand.hbm [shape: bf16[512,512], index: 3, kind: input, shape index: {}]
  %s4 = inlined_call_operand.hbm [shape: f32[1,512], index: 4, kind: input, shape index: {}]
  %s5 = inlined_call_operand.vmem [shape: f32[1,512], index: 5, kind: input, shape index: {}]
  %s6 = inlined_call_operand.hbm [shape: f32[96,512], index: 6, kind: output, shape index: {0}]
  %s7 = inlined_call_operand.hbm [shape: f32[96,512], index: 7, kind: output, shape index: {1}]
  %8 = xla_tuple %s6, %s7
  %s9 = sld [smem:[#allocation0]]
  $region93: #{tpu_custom_call.1} parent=0
    _
  %s11 = ssub.s32 1, %s9
  %s12 = scalar_select 0, %s11, %s9
  $region1: #{tpu_custom_call.1} parent=0
    #allocation5 [shape = 'u8[98304]{0}', space=vmem, size = 0x18000, scoped, tag = 'input window, operand 0']
    #allocation6 [shape = 's32[2]{0}', space=sflag, size = 0x8, scoped, tag = 'scoped memory for tpu_custom_call.1']
    #allocation7 [shape = 's32[2]{0}', space=sflag, size = 0x8, scoped, tag = 'scoped memory for tpu_custom_call.1']
    #allocation8 [shape = 'u8[98304]{0}', space=vmem, size = 0x18000, scoped, tag = 'input window, operand 1']
    #allocation9 [shape = 's32[2]{0}', space=sflag, size = 0x8, scoped, tag = 'scoped memory for tpu_custom_call.1']
    #allocation10 [shape = 'u8[262144]{0}', space=vmem, size = 0x40000, scoped, tag = 'input window, operand 2']
    #allocation11 [shape = 'u8[262144]{0}', space=vmem, size = 0x40000, scoped, tag = 'input window, operand 3']
    #allocation12 [shape = 's32[2]{0}', space=sflag, size = 0x8, scoped, tag = 'scoped memory for tpu_custom_call.1']
    #allocation13 [shape = 'u8[2048]{0}', space=vmem, size = 0x800, scoped, tag = 'input window, operand 4']
    #allocation14 [shape = 'u8[196608]{0}', space=vmem, size = 0x30000, scoped, tag = 'output window, operand 0']
    #allocation15 [shape = 'u8[196608]{0}', space=vmem, size = 0x30000, scoped, tag = 'output window, operand 1']
    #allocation16 [shape = 's32[2]{0}', space=sflag, size = 0x8, scoped, tag = 'scoped memory for tpu_custom_call.1']
    %13 = vsyncpa [#allocation6], 0
    %s14 = scalar_lea.sflag [#allocation6], 1
    %15 = vsyncpa %s14, 0
    %16 = vsyncpa [#allocation9], 0
    %s17 = scalar_lea.sflag [#allocation9], 1
    %18 = vsyncpa %s17, 0
    %19 = vsyncpa [#allocation12], 0
    %s20 = scalar_lea.sflag [#allocation12], 1
    %21 = vsyncpa %s20, 0
    %22 = vsyncpa [#allocation7], 0
    %s23 = scalar_lea.sflag [#allocation7], 1
    %24 = vsyncpa %s23, 0
    %25 = vsyncpa [#allocation16], 0
    %s26 = scalar_lea.sflag [#allocation16], 1
    %27 = vsyncpa %s26, 0
    loop: start=0, step=1, limit=6
    $region2: #{tpu_custom_call.1} parent=1 // loop_pre_header
      _
    $region3: #{tpu_custom_call.1} parent=1 // loop_header
      %s29 = sphi 0, %s33
      %p30 = scmp.ge.s32.totalorder %s29, 6
      %s36 = sphi 0, %s55
      %s37 = sphi 0, %s51
      %s38 = sphi 0, %s47
      %s39 = sphi 0, %s36
      %s40 = sphi 0, %s37
      %s41 = sphi 0, %s38
      %s42 = sphi 0, %s39
      %s43 = sphi 0, %s40
      %s44 = sphi 0, %s41
      %s60 = sphi 0, %s62
      %s63 = sphi 0, %s60
      %s64 = sphi 0, %s63
      %s80 = sphi 0, %s64
      %s88 = sphi 0, %s90
      %s91 = sphi 0, %s88
      %s92 = sphi 0, %s91
      %s108 = sphi 0, %s92
      %s116 = sphi 0, %s118
      %s119 = sphi 0, %s116
      %s120 = sphi 0, %s119
      %s136 = sphi 0, %s120
      %s144 = sphi 0, %s146
      %s147 = sphi 0, %s144
      %s148 = sphi 0, %s147
      %s164 = sphi 0, %s148
      %s170 = sphi 0, %s172
      %s173 = sphi 0, %s170
      %s174 = sphi 0, %s173
      %s190 = sphi 0, %s174
      %s196 = sphi 0, %s198
      %s199 = sphi 0, %s196
      %s200 = sphi 0, %s199
      %s216 = sphi 0, %s200
      %s224 = sphi 0, %s226
      %s227 = sphi 0, %s224
      %s228 = sphi 0, %s227
      %s244 = sphi 0, %s228
      %s252 = sphi 0, %s254
      %s255 = sphi 0, %s252
      %s256 = sphi 0, %s255
      %s272 = sphi 0, %s256
    $region4: #{tpu_custom_call.1} parent=1 // loop_header_branch
      %32 = sbr.rel (%p30) target = $region8
    $region5: #{tpu_custom_call.1} parent=1 // loop_body
      %s34 = ssub.s32 %s29, 1
      %s35 = ssub.s32 %s29, 2
      %s45 = sadd.s32 1, %s38
      %p46 = scmp.ge.s32.totalorder %s45, 2
      %s47 = scalar_select %p46, 0, %s45
      %s48 = sadd.s32 1, %s37
      %s49 = scalar_select %p46, %s48, %s37
      %p50 = scmp.ge.s32.totalorder %s49, 2
      %s51 = scalar_select %p50, 0, %s49
      %s52 = sadd.s32 1, %s36
      %s53 = scalar_select %p50, %s52, %s36
      %p54 = scmp.ge.s32.totalorder %s53, 1
      %s55 = scalar_select %p54, 0, %s53
      %s56 = ssub.s32 %s36, %s55
      %s57 = ssub.s32 %s38, %s47
      %s58 = sor.u32 %s56, %s57
      %p59 = scmp.eq.s32.totalorder %s58, 0
      %s61 = sadd.s32 %s60, 1
      %s62 = scalar_select %p59, %s60, %s61
      %p65 = pneg %p59
      %p66 = scmp.eq.s32.totalorder %s29, 3
      %p67 = por %p65, %p66
      %p68 = scmp.ne.s32.totalorder %s60, %s63
      %p69 = scmp.eq.s32.totalorder %s29, 0
      %p70 = por %p68, %p69
      %p71 = scmp.ne.s32.totalorder %s60, %s63
      %p72 = scmp.eq.s32.totalorder %s34, 3
      %p73 = por %p71, %p72
      %p74 = scmp.ne.s32.totalorder %s63, %s64
      %p75 = scmp.eq.s32.totalorder %s34, 0
      %p76 = por %p74, %p75
      %p77 = scmp.ne.s32.totalorder %s63, %s64
      %p78 = scmp.eq.s32.totalorder %s35, 3
      %p79 = por %p77, %p78
      %p81 = scmp.ne.s32.totalorder %s64, %s80
      %p82 = scmp.eq.s32.totalorder %s35, 0
      %p83 = por %p81, %p82
      %s84 = ssub.s32 %s36, %s55
      %s85 = ssub.s32 %s38, %s47
      %s86 = sor.u32 %s84, %s85
      %p87 = scmp.eq.s32.totalorder %s86, 0
      %s89 = sadd.s32 %s88, 1
      %s90 = scalar_select %p87, %s88, %s89
      %p93 = pneg %p87
      %p94 = scmp.eq.s32.totalorder %s29, 3
      %p95 = por %p93, %p94
      %p96 = scmp.ne.s32.totalorder %s88, %s91
      %p97 = scmp.eq.s32.totalorder %s29, 0
      %p98 = por %p96, %p97
      %p99 = scmp.ne.s32.totalorder %s88, %s91
      %p100 = scmp.eq.s32.totalorder %s34, 3
      %p101 = por %p99, %p100
      %p102 = scmp.ne.s32.totalorder %s91, %s92
      %p103 = scmp.eq.s32.totalorder %s34, 0
      %p104 = por %p102, %p103
      %p105 = scmp.ne.s32.totalorder %s91, %s92
      %p106 = scmp.eq.s32.totalorder %s35, 3
      %p107 = por %p105, %p106
      %p109 = scmp.ne.s32.totalorder %s92, %s108
      %p110 = scmp.eq.s32.totalorder %s35, 0
      %p111 = por %p109, %p110
      %s112 = ssub.s32 %s38, %s47
      %s113 = ssub.s32 %s37, %s51
      %s114 = sor.u32 %s112, %s113
      %p115 = scmp.eq.s32.totalorder %s114, 0
      %s117 = sadd.s32 %s116, 1
      %s118 = scalar_select %p115, %s116, %s117
      %p121 = pneg %p115
      %p122 = scmp.eq.s32.totalorder %s29, 3
      %p123 = por %p121, %p122
      %p124 = scmp.ne.s32.totalorder %s116, %s119
      %p125 = scmp.eq.s32.totalorder %s29, 0
      %p126 = por %p124, %p125
      %p127 = scmp.ne.s32.totalorder %s116, %s119
      %p128 = scmp.eq.s32.totalorder %s34, 3
      %p129 = por %p127, %p128
      %p130 = scmp.ne.s32.totalorder %s119, %s120
      %p131 = scmp.eq.s32.totalorder %s34, 0
      %p132 = por %p130, %p131
      %p133 = scmp.ne.s32.totalorder %s119, %s120
      %p134 = scmp.eq.s32.totalorder %s35, 3
      %p135 = por %p133, %p134
      %p137 = scmp.ne.s32.totalorder %s120, %s136
      %p138 = scmp.eq.s32.totalorder %s35, 0
      %p139 = por %p137, %p138
      %s140 = ssub.s32 %s38, %s47
      %s141 = ssub.s32 %s37, %s51
      %s142 = sor.u32 %s140, %s141
      %p143 = scmp.eq.s32.totalorder %s142, 0
      %s145 = sadd.s32 %s144, 1
      %s146 = scalar_select %p143, %s144, %s145
      %p149 = pneg %p143
      %p150 = scmp.eq.s32.totalorder %s29, 3
      %p151 = por %p149, %p150
      %p152 = scmp.ne.s32.totalorder %s144, %s147
      %p153 = scmp.eq.s32.totalorder %s29, 0
      %p154 = por %p152, %p153
      %p155 = scmp.ne.s32.totalorder %s144, %s147
      %p156 = scmp.eq.s32.totalorder %s34, 3
      %p157 = por %p155, %p156
      %p158 = scmp.ne.s32.totalorder %s147, %s148
      %p159 = scmp.eq.s32.totalorder %s34, 0
      %p160 = por %p158, %p159
      %p161 = scmp.ne.s32.totalorder %s147, %s148
      %p162 = scmp.eq.s32.totalorder %s35, 3
      %p163 = por %p161, %p162
      %p165 = scmp.ne.s32.totalorder %s148, %s164
      %p166 = scmp.eq.s32.totalorder %s35, 0
      %p167 = por %p165, %p166
      %s168 = ssub.s32 %s37, %s51
      %p169 = scmp.eq.s32.totalorder %s168, 0
      %s171 = sadd.s32 %s170, 1
      %s172 = scalar_select %p169, %s170, %s171
      %p175 = pneg %p169
      %p176 = scmp.eq.s32.totalorder %s29, 3
      %p177 = por %p175, %p176
      %p178 = scmp.ne.s32.totalorder %s170, %s173
      %p179 = scmp.eq.s32.totalorder %s29, 0
      %p180 = por %p178, %p179
      %p181 = scmp.ne.s32.totalorder %s170, %s173
      %p182 = scmp.eq.s32.totalorder %s34, 3
      %p183 = por %p181, %p182
      %p184 = scmp.ne.s32.totalorder %s173, %s174
      %p185 = scmp.eq.s32.totalorder %s34, 0
      %p186 = por %p184, %p185
      %p187 = scmp.ne.s32.totalorder %s173, %s174
      %p188 = scmp.eq.s32.totalorder %s35, 3
      %p189 = por %p187, %p188
      %p191 = scmp.ne.s32.totalorder %s174, %s190
      %p192 = scmp.eq.s32.totalorder %s35, 0
      %p193 = por %p191, %p192
      %s194 = ssub.s32 %s37, %s51
      %p195 = scmp.eq.s32.totalorder %s194, 0
      %s197 = sadd.s32 %s196, 1
      %s198 = scalar_select %p195, %s196, %s197
      %p201 = pneg %p195
      %p202 = scmp.eq.s32.totalorder %s29, 3
      %p203 = por %p201, %p202
      %p204 = scmp.ne.s32.totalorder %s196, %s199
      %p205 = scmp.eq.s32.totalorder %s29, 0
      %p206 = por %p204, %p205
      %p207 = scmp.ne.s32.totalorder %s196, %s199
      %p208 = scmp.eq.s32.totalorder %s34, 3
      %p209 = por %p207, %p208
      %p210 = scmp.ne.s32.totalorder %s199, %s200
      %p211 = scmp.eq.s32.totalorder %s34, 0
      %p212 = por %p210, %p211
      %p213 = scmp.ne.s32.totalorder %s199, %s200
      %p214 = scmp.eq.s32.totalorder %s35, 3
      %p215 = por %p213, %p214
      %p217 = scmp.ne.s32.totalorder %s200, %s216
      %p218 = scmp.eq.s32.totalorder %s35, 0
      %p219 = por %p217, %p218
      %s220 = ssub.s32 %s36, %s55
      %s221 = ssub.s32 %s37, %s51
      %s222 = sor.u32 %s220, %s221
      %p223 = scmp.eq.s32.totalorder %s222, 0
      %s225 = sadd.s32 %s224, 1
      %s226 = scalar_select %p223, %s224, %s225
      %p229 = pneg %p223
      %p230 = scmp.eq.s32.totalorder %s29, 3
      %p231 = por %p229, %p230
      %p232 = scmp.ne.s32.totalorder %s224, %s227
      %p233 = scmp.eq.s32.totalorder %s29, 0
      %p234 = por %p232, %p233
      %p235 = scmp.ne.s32.totalorder %s224, %s227
      %p236 = scmp.eq.s32.totalorder %s34, 3
      %p237 = por %p235, %p236
      %p238 = scmp.ne.s32.totalorder %s227, %s228
      %p239 = scmp.eq.s32.totalorder %s34, 0
      %p240 = por %p238, %p239
      %p241 = scmp.ne.s32.totalorder %s227, %s228
      %p242 = scmp.eq.s32.totalorder %s35, 3
      %p243 = por %p241, %p242
      %p245 = scmp.ne.s32.totalorder %s228, %s244
      %p246 = scmp.eq.s32.totalorder %s35, 0
      %p247 = por %p245, %p246
      %s248 = ssub.s32 %s36, %s55
      %s249 = ssub.s32 %s37, %s51
      %s250 = sor.u32 %s248, %s249
      %p251 = scmp.eq.s32.totalorder %s250, 0
      %s253 = sadd.s32 %s252, 1
      %s254 = scalar_select %p251, %s252, %s253
      %p257 = pneg %p251
      %p258 = scmp.eq.s32.totalorder %s29, 3
      %p259 = por %p257, %p258
      %p260 = scmp.ne.s32.totalorder %s252, %s255
      %p261 = scmp.eq.s32.totalorder %s29, 0
      %p262 = por %p260, %p261
      %p263 = scmp.ne.s32.totalorder %s252, %s255
      %p264 = scmp.eq.s32.totalorder %s34, 3
      %p265 = por %p263, %p264
      %p266 = scmp.ne.s32.totalorder %s255, %s256
      %p267 = scmp.eq.s32.totalorder %s34, 0
      %p268 = por %p266, %p267
      %p269 = scmp.ne.s32.totalorder %s255, %s256
      %p270 = scmp.eq.s32.totalorder %s35, 3
      %p271 = por %p269, %p270
      %p273 = scmp.ne.s32.totalorder %s256, %s272
      %p274 = scmp.eq.s32.totalorder %s35, 0
      %p275 = por %p273, %p274
      %p276 = scmp.le.s32.totalorder 1, %s29
      %p277 = scmp.lt.s32.totalorder %s29, 5
      %p278 = pnand %p276, %p277
      %p279 = pneg %p278
      // Predicated region
      $region9: #{tpu_custom_call.1} parent=5 // pred_check
        _
      $region10: #{tpu_custom_call.1} parent=5 // pred_check_branch
        %281 = sbr.rel (%p278) target = $region12
      $region11: #{tpu_custom_call.1} parent=5 // pred_region
        %s282 = ssub.s32 %s29, 1
      $region12: #{tpu_custom_call.1} parent=5 // pred_fallthru
        _
      %p283 = scmp.lt.s32.totalorder %s29, 4
      // Predicated region
      $region13: #{tpu_custom_call.1} parent=5 // pred_check
        %p284 = pneg %p283
      $region14: #{tpu_custom_call.1} parent=5 // pred_check_branch
        %286 = sbr.rel (%p284) target = $region16
      $region15: #{tpu_custom_call.1} parent=5 // pred_region
        // Predicated region
        $region17: #{tpu_custom_call.1} parent=15 // pred_check
          %p287 = pneg %p70
        $region18: #{tpu_custom_call.1} parent=15 // pred_check_branch
          %289 = sbr.rel (%p287) target = $region20
        $region19: #{tpu_custom_call.1} parent=15 // pred_region
          %s290 = sand.u32 %s60, 1
          %s291 = scalar_lea.sflag [#allocation6], %s290
          %s292 = sand.u32 %s60, 1
          %s293 = smul.addr %s292, 96
          %s294 = scalar_lea.vmem [#allocation5], %s293
          %s295 = smul.u32 12, %s36
          %s296 = smul.u32 2, %s38
          %298 = vsyncadd %s291, 0
          %s299 = smul.addr %s295, 4
          %s300 = sadd.s32 %s296, %s299
          %s301 = smul.addr %s300, 4
          %s302 = scalar_lea.hbm %s0, %s301
          %s303 = sshll.u32 %s302, 4
          %s304 = int_to_ptr.hbm [resolvable:$true] %s303
          %s305 = sshll.u32 %s294, 4
          %s306 = int_to_ptr.vmem [resolvable:$true] %s305
          %311 = dma.hbm_to_vmem [thread:$0]  %s304, 1536, %s306, %s291, 256, 128, 8
        $region20: #{tpu_custom_call.1} parent=15 // pred_fallthru
          _
        // Predicated region
        $region21: #{tpu_custom_call.1} parent=15 // pred_check
          %p312 = pneg %p98
        $region22: #{tpu_custom_call.1} parent=15 // pred_check_branch
          %314 = sbr.rel (%p312) target = $region24
        $region23: #{tpu_custom_call.1} parent=15 // pred_region
          %s315 = sand.u32 %s29, 1
          %s316 = scalar_lea.sflag [#allocation9], %s315
          %s317 = sand.u32 %s88, 1
          %s318 = smul.addr %s317, 96
          %s319 = scalar_lea.vmem [#allocation8], %s318
          %s320 = smul.u32 12, %s36
          %s321 = smul.u32 2, %s38
          %323 = vsyncadd %s316, 0
          %s324 = smul.addr %s320, 4
          %s325 = sadd.s32 %s321, %s324
          %s326 = smul.addr %s325, 4
          %s327 = scalar_lea.hbm %s1, %s326
          %s328 = sshll.u32 %s327, 4
          %s329 = int_to_ptr.hbm [resolvable:$true] %s328
          %s330 = sshll.u32 %s319, 4
          %s331 = int_to_ptr.vmem [resolvable:$true] %s330
          %336 = dma.hbm_to_vmem [thread:$0]  %s329, 1536, %s331, %s316, 256, 128, 8
        $region24: #{tpu_custom_call.1} parent=15 // pred_fallthru
          _
        // Predicated region
        $region25: #{tpu_custom_call.1} parent=15 // pred_check
          %p337 = pneg %p126
        $region26: #{tpu_custom_call.1} parent=15 // pred_check_branch
          %339 = sbr.rel (%p337) target = $region28
        $region27: #{tpu_custom_call.1} parent=15 // pred_region
          %s340 = sand.u32 %s29, 1
          %s341 = scalar_lea.sflag [#allocation9], %s340
          %s342 = sand.u32 %s116, 1
          %s343 = smul.addr %s342, 256
          %s344 = scalar_lea.vmem [#allocation10], %s343
          %s345 = smul.u32 32, %s38
          %s346 = smul.u32 2, %s37
          %348 = vsyncadd %s341, 0
          %s349 = smul.addr %s345, 4
          %s350 = sadd.s32 %s346, %s349
          %s351 = smul.addr %s350, 4
          %s352 = scalar_lea.hbm %s2, %s351
          %s353 = sshll.u32 %s352, 4
          %s354 = int_to_ptr.hbm [resolvable:$true] %s353
          %s355 = sshll.u32 %s344, 4
          %s356 = int_to_ptr.vmem [resolvable:$true] %s355
          %361 = dma.hbm_to_vmem [thread:$0]  %s354, 4096, %s356, %s341, 256, 128, 8
        $region28: #{tpu_custom_call.1} parent=15 // pred_fallthru
          _
        // Predicated region
        $region29: #{tpu_custom_call.1} parent=15 // pred_check
          %p362 = pneg %p154
        $region30: #{tpu_custom_call.1} parent=15 // pred_check_branch
          %364 = sbr.rel (%p362) target = $region32
        $region31: #{tpu_custom_call.1} parent=15 // pred_region
          %s365 = sand.u32 %s29, 1
          %s366 = scalar_lea.sflag [#allocation12], %s365
          %s367 = sand.u32 %s144, 1
          %s368 = smul.addr %s367, 256
          %s369 = scalar_lea.vmem [#allocation11], %s368
          %s370 = smul.u32 32, %s38
          %s371 = smul.u32 2, %s37
          %373 = vsyncadd %s366, 0
          %s374 = smul.addr %s370, 4
          %s375 = sadd.s32 %s371, %s374
          %s376 = smul.addr %s375, 4
          %s377 = scalar_lea.hbm %s3, %s376
          %s378 = sshll.u32 %s377, 4
          %s379 = int_to_ptr.hbm [resolvable:$true] %s378
          %s380 = sshll.u32 %s369, 4
          %s381 = int_to_ptr.vmem [resolvable:$true] %s380
          %386 = dma.hbm_to_vmem [thread:$0]  %s379, 4096, %s381, %s366, 256, 128, 8
        $region32: #{tpu_custom_call.1} parent=15 // pred_fallthru
          _
        // Predicated region
        $region33: #{tpu_custom_call.1} parent=15 // pred_check
          %p387 = pneg %p180
        $region34: #{tpu_custom_call.1} parent=15 // pred_check_branch
          %389 = sbr.rel (%p387) target = $region36
        $region35: #{tpu_custom_call.1} parent=15 // pred_region
          %s390 = sand.u32 %s29, 1
          %s391 = scalar_lea.sflag [#allocation12], %s390
          %s392 = sand.u32 %s170, 1
          %s393 = smul.addr %s392, 2
          %s394 = scalar_lea.vmem [#allocation13], %s393
          %s395 = smul.u32 2, %s37
          %397 = vsyncadd %s391, 0
          %s398 = scalar_lea.hbm %s4, %s395
          %s400 = sshll.u32 %s398, 4
          %s401 = int_to_ptr.hbm [resolvable:$true] %s400
          %s402 = sshll.u32 %s394, 4
          %s403 = int_to_ptr.vmem [resolvable:$true] %s402
          %405 = dma.hbm_to_vmem [thread:$0]  %s401, 32, %s403, %s391
        $region36: #{tpu_custom_call.1} parent=15 // pred_fallthru
          _
        // Predicated region
        $region37: #{tpu_custom_call.1} parent=15 // pred_check
          %p406 = pneg %p206
        $region38: #{tpu_custom_call.1} parent=15 // pred_check_branch
          %408 = sbr.rel (%p406) target = $region40
        $region39: #{tpu_custom_call.1} parent=15 // pred_region
          %s409 = smul.u32 2, %s37
          %p410 = scmp.lt.s32.totalorder %s409, 3
          %s411 = scalar_select %p410, %s409, 3
          %s412 = scalar_lea.vmem %s5, %s411
          %s413 = smul.u32 2, %s37
        $region40: #{tpu_custom_call.1} parent=15 // pred_fallthru
          _
      $region16: #{tpu_custom_call.1} parent=5 // pred_fallthru
        _
      %p414 = scmp.le.s32.totalorder 1, %s29
      %p415 = scmp.lt.s32.totalorder %s29, 5
      %p416 = pnand %p414, %p415
      %p417 = pneg %p416
      // Predicated region
      $region41: #{tpu_custom_call.1} parent=5 // pred_check
        _
      $region42: #{tpu_custom_call.1} parent=5 // pred_check_branch
        %419 = sbr.rel (%p416) target = $region44
      $region43: #{tpu_custom_call.1} parent=5 // pred_region
        %s420 = ssub.s32 %s29, 1
        %s421 = sand.u32 %s63, 1
        %s422 = scalar_lea.sflag [#allocation6], %s421
        %s423 = sand.u32 %s63, 1
        %s424 = smul.addr %s423, 96
        %s425 = scalar_lea.vmem [#allocation5], %s424
        // Predicated region
        $region45: #{tpu_custom_call.1} parent=43 // pred_check
          %p426 = pneg %p76
        $region46: #{tpu_custom_call.1} parent=43 // pred_check_branch
          %428 = sbr.rel (%p426) target = $region48
        $region47: #{tpu_custom_call.1} parent=43 // pred_region
          %430 = dma.done %s422, 1536
        $region48: #{tpu_custom_call.1} parent=43 // pred_fallthru
          _
        %s431 = sand.u32 %s34, 1
        %s432 = scalar_lea.sflag [#allocation9], %s431
        %s433 = sand.u32 %s91, 1
        %s434 = smul.addr %s433, 96
        %s435 = scalar_lea.vmem [#allocation8], %s434
        // Predicated region
        $region49: #{tpu_custom_call.1} parent=43 // pred_check
          %p436 = pneg %p104
        $region50: #{tpu_custom_call.1} parent=43 // pred_check_branch
          %438 = sbr.rel (%p436) target = $region52
        $region51: #{tpu_custom_call.1} parent=43 // pred_region
          %440 = dma.done %s432, 1536
        $region52: #{tpu_custom_call.1} parent=43 // pred_fallthru
          _
        %s441 = sand.u32 %s34, 1
        %s442 = scalar_lea.sflag [#allocation9], %s441
        %s443 = sand.u32 %s119, 1
        %s444 = smul.addr %s443, 256
        %s445 = scalar_lea.vmem [#allocation10], %s444
        // Predicated region
        $region53: #{tpu_custom_call.1} parent=43 // pred_check
          %p446 = pneg %p132
        $region54: #{tpu_custom_call.1} parent=43 // pred_check_branch
          %448 = sbr.rel (%p446) target = $region56
        $region55: #{tpu_custom_call.1} parent=43 // pred_region
          %450 = dma.done %s442, 4096
        $region56: #{tpu_custom_call.1} parent=43 // pred_fallthru
          _
        %s451 = sand.u32 %s34, 1
        %s452 = scalar_lea.sflag [#allocation12], %s451
        %s453 = sand.u32 %s147, 1
        %s454 = smul.addr %s453, 256
        %s455 = scalar_lea.vmem [#allocation11], %s454
        // Predicated region
        $region57: #{tpu_custom_call.1} parent=43 // pred_check
          %p456 = pneg %p160
        $region58: #{tpu_custom_call.1} parent=43 // pred_check_branch
          %458 = sbr.rel (%p456) target = $region60
        $region59: #{tpu_custom_call.1} parent=43 // pred_region
          %460 = dma.done %s452, 4096
        $region60: #{tpu_custom_call.1} parent=43 // pred_fallthru
          _
        %s461 = sand.u32 %s34, 1
        %s462 = scalar_lea.sflag [#allocation12], %s461
        %s463 = sand.u32 %s173, 1
        %s464 = smul.addr %s463, 2
        %s465 = scalar_lea.vmem [#allocation13], %s464
        // Predicated region
        $region61: #{tpu_custom_call.1} parent=43 // pred_check
          %p466 = pneg %p186
        $region62: #{tpu_custom_call.1} parent=43 // pred_check_branch
          %468 = sbr.rel (%p466) target = $region64
        $region63: #{tpu_custom_call.1} parent=43 // pred_region
          %470 = dma.done %s462, 32
        $region64: #{tpu_custom_call.1} parent=43 // pred_fallthru
          _
        %s471 = sand.u32 %s63, 1
        %s472 = scalar_lea.sflag [#allocation6], %s471
        %s473 = sand.u32 %s63, 1
        %s474 = smul.addr %s473, 96
        %s475 = scalar_lea.vmem [#allocation5], %s474
        %p476 = pneg %p76
        %p477 = pneg %p73
        %s478 = sand.u32 %s34, 1
        %s479 = scalar_lea.sflag [#allocation9], %s478
        %s480 = sand.u32 %s91, 1
        %s481 = smul.addr %s480, 96
        %s482 = scalar_lea.vmem [#allocation8], %s481
        %p483 = pneg %p104
        %p484 = pneg %p101
        %s485 = sand.u32 %s34, 1
        %s486 = scalar_lea.sflag [#allocation9], %s485
        %s487 = sand.u32 %s119, 1
        %s488 = smul.addr %s487, 256
        %s489 = scalar_lea.vmem [#allocation10], %s488
        %p490 = pneg %p132
        %p491 = pneg %p129
        %s492 = sand.u32 %s34, 1
        %s493 = scalar_lea.sflag [#allocation12], %s492
        %s494 = sand.u32 %s147, 1
        %s495 = smul.addr %s494, 256
        %s496 = scalar_lea.vmem [#allocation11], %s495
        %p497 = pneg %p160
        %p498 = pneg %p157
        %s499 = sand.u32 %s34, 1
        %s500 = scalar_lea.sflag [#allocation12], %s499
        %s501 = sand.u32 %s173, 1
        %s502 = smul.addr %s501, 2
        %s503 = scalar_lea.vmem [#allocation13], %s502
        %p504 = pneg %p186
        %p505 = pneg %p183
        %s506 = smul.u32 2, %s40
        %p507 = scmp.lt.s32.totalorder %s506, 3
        %s508 = scalar_select %p507, %s506, 3
        %s509 = scalar_lea.vmem %s5, %s508
        %p510 = pneg %p212
        %p511 = pneg %p209
        %p512 = pneg %p240
        %p513 = pneg %p237
        %s514 = sand.u32 %s227, 1
        %s515 = scalar_lea.sflag [#allocation7], %s514
        %s516 = sand.u32 %s227, 1
        %s517 = smul.addr %s516, 192
        %s518 = scalar_lea.vmem [#allocation14], %s517
        %p519 = pneg %p268
        %p520 = pneg %p265
        %s521 = sand.u32 %s255, 1
        %s522 = scalar_lea.sflag [#allocation16], %s521
        %s523 = sand.u32 %s255, 1
        %s524 = smul.addr %s523, 192
        %s525 = scalar_lea.vmem [#allocation15], %s524
        %s526 = smul.u32 12, %s39
        %s527 = smul.u32 2, %s41
        %s528 = smul.u32 12, %s39
        %s529 = smul.u32 2, %s41
        %s530 = smul.u32 32, %s41
        %s531 = smul.u32 2, %s40
        %s532 = smul.u32 32, %s41
        %s533 = smul.u32 2, %s40
        %s534 = smul.u32 2, %s40
        %s535 = smul.u32 2, %s40
        %p536 = scmp.lt.s32.totalorder %s535, 3
        %s537 = scalar_select %p536, %s535, 3
        %s538 = scalar_lea.vmem %s5, %s537
        %s539 = smul.u32 2, %s40
        %s540 = smul.u32 12, %s39
        %s541 = smul.u32 2, %s40
        %s542 = smul.u32 12, %s39
        %s543 = smul.u32 2, %s40
        %p544 = scmp.eq.s32.totalorder %s41, 0
        // Predicated region
        $region65: #{tpu_custom_call.1} parent=43 // pred_check
          %p545 = pneg %p544
        $region66: #{tpu_custom_call.1} parent=43 // pred_check_branch
          %547 = sbr.rel (%p545) target = $region68
        $region67: #{tpu_custom_call.1} parent=43 // pred_region
          %548 = vst [vmem:[#allocation2] sm:$0xff] 0.0
          %549 = vst [vmem:[#allocation2 + $0x8] sm:$0xff] 0.0
          %550 = vst [vmem:[#allocation2 + $0x10] sm:$0xff] 0.0
          %551 = vst [vmem:[#allocation2 + $0x18] sm:$0xff] 0.0
          %552 = vst [vmem:[#allocation2 + $0x20] sm:$0xff] 0.0
          %553 = vst [vmem:[#allocation2 + $0x28] sm:$0xff] 0.0
          %554 = vst [vmem:[#allocation2 + $0x30] sm:$0xff] 0.0
          %555 = vst [vmem:[#allocation2 + $0x38] sm:$0xff] 0.0
          %556 = vst [vmem:[#allocation2 + $0x40] sm:$0xff] 0.0
          %557 = vst [vmem:[#allocation2 + $0x48] sm:$0xff] 0.0
          %558 = vst [vmem:[#allocation2 + $0x50] sm:$0xff] 0.0
          %559 = vst [vmem:[#allocation2 + $0x58] sm:$0xff] 0.0
          %560 = vst [vmem:[#allocation2 + $0x60] sm:$0xff] 0.0
          %561 = vst [vmem:[#allocation2 + $0x68] sm:$0xff] 0.0
          %562 = vst [vmem:[#allocation2 + $0x70] sm:$0xff] 0.0
          %563 = vst [vmem:[#allocation2 + $0x78] sm:$0xff] 0.0
          %564 = vst [vmem:[#allocation2 + $0x80] sm:$0xff] 0.0
          %565 = vst [vmem:[#allocation2 + $0x88] sm:$0xff] 0.0
          %566 = vst [vmem:[#allocation2 + $0x90] sm:$0xff] 0.0
          %567 = vst [vmem:[#allocation2 + $0x98] sm:$0xff] 0.0
          %568 = vst [vmem:[#allocation2 + $0xa0] sm:$0xff] 0.0
          %569 = vst [vmem:[#allocation2 + $0xa8] sm:$0xff] 0.0
          %570 = vst [vmem:[#allocation2 + $0xb0] sm:$0xff] 0.0
          %571 = vst [vmem:[#allocation2 + $0xb8] sm:$0xff] 0.0
          %572 = vst [vmem:[#allocation3] sm:$0xff] 0.0
          %573 = vst [vmem:[#allocation3 + $0x8] sm:$0xff] 0.0
          %574 = vst [vmem:[#allocation3 + $0x10] sm:$0xff] 0.0
          %575 = vst [vmem:[#allocation3 + $0x18] sm:$0xff] 0.0
          %576 = vst [vmem:[#allocation3 + $0x20] sm:$0xff] 0.0
          %577 = vst [vmem:[#allocation3 + $0x28] sm:$0xff] 0.0
          %578 = vst [vmem:[#allocation3 + $0x30] sm:$0xff] 0.0
          %579 = vst [vmem:[#allocation3 + $0x38] sm:$0xff] 0.0
          %580 = vst [vmem:[#allocation3 + $0x40] sm:$0xff] 0.0
          %581 = vst [vmem:[#allocation3 + $0x48] sm:$0xff] 0.0
          %582 = vst [vmem:[#allocation3 + $0x50] sm:$0xff] 0.0
          %583 = vst [vmem:[#allocation3 + $0x58] sm:$0xff] 0.0
          %584 = vst [vmem:[#allocation3 + $0x60] sm:$0xff] 0.0
          %585 = vst [vmem:[#allocation3 + $0x68] sm:$0xff] 0.0
          %586 = vst [vmem:[#allocation3 + $0x70] sm:$0xff] 0.0
          %587 = vst [vmem:[#allocation3 + $0x78] sm:$0xff] 0.0
          %588 = vst [vmem:[#allocation3 + $0x80] sm:$0xff] 0.0
          %589 = vst [vmem:[#allocation3 + $0x88] sm:$0xff] 0.0
          %590 = vst [vmem:[#allocation3 + $0x90] sm:$0xff] 0.0
          %591 = vst [vmem:[#allocation3 + $0x98] sm:$0xff] 0.0
          %592 = vst [vmem:[#allocation3 + $0xa0] sm:$0xff] 0.0
          %593 = vst [vmem:[#allocation3 + $0xa8] sm:$0xff] 0.0
          %594 = vst [vmem:[#allocation3 + $0xb0] sm:$0xff] 0.0
          %595 = vst [vmem:[#allocation3 + $0xb8] sm:$0xff] 0.0
          %596 = vst [vmem:[#allocation4] sm:$0xff] 0.0
          %597 = vst [vmem:[#allocation4 + $0x8] sm:$0xff] 0.0
          %598 = vst [vmem:[#allocation4 + $0x10] sm:$0xff] 0.0
          %599 = vst [vmem:[#allocation4 + $0x18] sm:$0xff] 0.0
          %600 = vst [vmem:[#allocation4 + $0x20] sm:$0xff] 0.0
          %601 = vst [vmem:[#allocation4 + $0x28] sm:$0xff] 0.0
          %602 = vst [vmem:[#allocation4 + $0x30] sm:$0xff] 0.0
          %603 = vst [vmem:[#allocation4 + $0x38] sm:$0xff] 0.0
          %604 = vst [vmem:[#allocation4 + $0x40] sm:$0xff] 0.0
          %605 = vst [vmem:[#allocation4 + $0x48] sm:$0xff] 0.0
          %606 = vst [vmem:[#allocation4 + $0x50] sm:$0xff] 0.0
          %607 = vst [vmem:[#allocation4 + $0x58] sm:$0xff] 0.0
          %608 = vst [vmem:[#allocation4 + $0x60] sm:$0xff] 0.0
          %609 = vst [vmem:[#allocation4 + $0x68] sm:$0xff] 0.0
          %610 = vst [vmem:[#allocation4 + $0x70] sm:$0xff] 0.0
          %611 = vst [vmem:[#allocation4 + $0x78] sm:$0xff] 0.0
          %612 = vst [vmem:[#allocation4 + $0x80] sm:$0xff] 0.0
          %613 = vst [vmem:[#allocation4 + $0x88] sm:$0xff] 0.0
          %614 = vst [vmem:[#allocation4 + $0x90] sm:$0xff] 0.0
          %615 = vst [vmem:[#allocation4 + $0x98] sm:$0xff] 0.0
          %616 = vst [vmem:[#allocation4 + $0xa0] sm:$0xff] 0.0
          %617 = vst [vmem:[#allocation4 + $0xa8] sm:$0xff] 0.0
          %618 = vst [vmem:[#allocation4 + $0xb0] sm:$0xff] 0.0
          %619 = vst [vmem:[#allocation4 + $0xb8] sm:$0xff] 0.0
        $region68: #{tpu_custom_call.1} parent=43 // pred_fallthru
          _
        %v620 = vld [vmem:[%s425] sm:$0xff]
        %v621 = vld [vmem:[%s425 + $0x8] sm:$0xff]
        %v622 = vld [vmem:[%s425 + $0x10] sm:$0xff]
        %v623 = vld [vmem:[%s425 + $0x18] sm:$0xff]
        %v624 = vld [vmem:[%s425 + $0x20] sm:$0xff]
        %v625 = vld [vmem:[%s425 + $0x28] sm:$0xff]
        %v626 = vld [vmem:[%s425 + $0x30] sm:$0xff]
        %v627 = vld [vmem:[%s425 + $0x38] sm:$0xff]
        %v628 = vld [vmem:[%s425 + $0x40] sm:$0xff]
        %v629 = vld [vmem:[%s425 + $0x48] sm:$0xff]
        %v630 = vld [vmem:[%s425 + $0x50] sm:$0xff]
        %v631 = vld [vmem:[%s425 + $0x58] sm:$0xff]
        %v632 = vld [vmem:[%s435] sm:$0xff]
        %v633 = vld [vmem:[%s435 + $0x8] sm:$0xff]
        %v634 = vld [vmem:[%s435 + $0x10] sm:$0xff]
        %v635 = vld [vmem:[%s435 + $0x18] sm:$0xff]
        %v636 = vld [vmem:[%s435 + $0x20] sm:$0xff]
        %v637 = vld [vmem:[%s435 + $0x28] sm:$0xff]
        %v638 = vld [vmem:[%s435 + $0x30] sm:$0xff]
        %v639 = vld [vmem:[%s435 + $0x38] sm:$0xff]
        %v640 = vld [vmem:[%s435 + $0x40] sm:$0xff]
        %v641 = vld [vmem:[%s435 + $0x48] sm:$0xff]
        %v642 = vld [vmem:[%s435 + $0x50] sm:$0xff]
        %v643 = vld [vmem:[%s435 + $0x58] sm:$0xff]
        %v644 = vld [vmem:[%s445] sm:$0xff]
        %v645 = vld [vmem:[%s445 + $0x8] sm:$0xff]
        %v646 = vld [vmem:[%s445 + $0x10] sm:$0xff]
        %v647 = vld [vmem:[%s445 + $0x18] sm:$0xff]
        %v648 = vld [vmem:[%s445 + $0x20] sm:$0xff]
        %v649 = vld [vmem:[%s445 + $0x28] sm:$0xff]
        %v650 = vld [vmem:[%s445 + $0x30] sm:$0xff]
        %v651 = vld [vmem:[%s445 + $0x38] sm:$0xff]
        %v652 = vld [vmem:[%s445 + $0x40] sm:$0xff]
        %v653 = vld [vmem:[%s445 + $0x48] sm:$0xff]
        %v654 = vld [vmem:[%s445 + $0x50] sm:$0xff]
        %v655 = vld [vmem:[%s445 + $0x58] sm:$0xff]
        %v656 = vld [vmem:[%s445 + $0x60] sm:$0xff]
        %v657 = vld [vmem:[%s445 + $0x68] sm:$0xff]
        %v658 = vld [vmem:[%s445 + $0x70] sm:$0xff]
        %v659 = vld [vmem:[%s445 + $0x78] sm:$0xff]
        %v660 = vld [vmem:[%s445 + $0x80] sm:$0xff]
        %v661 = vld [vmem:[%s445 + $0x88] sm:$0xff]
        %v662 = vld [vmem:[%s445 + $0x90] sm:$0xff]
        %v663 = vld [vmem:[%s445 + $0x98] sm:$0xff]
        %v664 = vld [vmem:[%s445 + $0xa0] sm:$0xff]
        %v665 = vld [vmem:[%s445 + $0xa8] sm:$0xff]
        %v666 = vld [vmem:[%s445 + $0xb0] sm:$0xff]
        %v667 = vld [vmem:[%s445 + $0xb8] sm:$0xff]
        %v668 = vld [vmem:[%s445 + $0xc0] sm:$0xff]
        %v669 = vld [vmem:[%s445 + $0xc8] sm:$0xff]
        %v670 = vld [vmem:[%s445 + $0xd0] sm:$0xff]
        %v671 = vld [vmem:[%s445 + $0xd8] sm:$0xff]
        %v672 = vld [vmem:[%s445 + $0xe0] sm:$0xff]
        %v673 = vld [vmem:[%s445 + $0xe8] sm:$0xff]
        %v674 = vld [vmem:[%s445 + $0xf0] sm:$0xff]
        %v675 = vld [vmem:[%s445 + $0xf8] sm:$0xff]
        %v676 = vld [vmem:[%s455] sm:$0xff]
        %v677 = vld [vmem:[%s455 + $0x8] sm:$0xff]
        %v678 = vld [vmem:[%s455 + $0x10] sm:$0xff]
        %v679 = vld [vmem:[%s455 + $0x18] sm:$0xff]
        %v680 = vld [vmem:[%s455 + $0x20] sm:$0xff]
        %v681 = vld [vmem:[%s455 + $0x28] sm:$0xff]
        %v682 = vld [vmem:[%s455 + $0x30] sm:$0xff]
        %v683 = vld [vmem:[%s455 + $0x38] sm:$0xff]
        %v684 = vld [vmem:[%s455 + $0x40] sm:$0xff]
        %v685 = vld [vmem:[%s455 + $0x48] sm:$0xff]
        %v686 = vld [vmem:[%s455 + $0x50] sm:$0xff]
        %v687 = vld [vmem:[%s455 + $0x58] sm:$0xff]
        %v688 = vld [vmem:[%s455 + $0x60] sm:$0xff]
        %v689 = vld [vmem:[%s455 + $0x68] sm:$0xff]
        %v690 = vld [vmem:[%s455 + $0x70] sm:$0xff]
        %v691 = vld [vmem:[%s455 + $0x78] sm:$0xff]
        %v692 = vld [vmem:[%s455 + $0x80] sm:$0xff]
        %v693 = vld [vmem:[%s455 + $0x88] sm:$0xff]
        %v694 = vld [vmem:[%s455 + $0x90] sm:$0xff]
        %v695 = vld [vmem:[%s455 + $0x98] sm:$0xff]
        %v696 = vld [vmem:[%s455 + $0xa0] sm:$0xff]
        %v697 = vld [vmem:[%s455 + $0xa8] sm:$0xff]
        %v698 = vld [vmem:[%s455 + $0xb0] sm:$0xff]
        %v699 = vld [vmem:[%s455 + $0xb8] sm:$0xff]
        %v700 = vld [vmem:[%s455 + $0xc0] sm:$0xff]
        %v701 = vld [vmem:[%s455 + $0xc8] sm:$0xff]
        %v702 = vld [vmem:[%s455 + $0xd0] sm:$0xff]
        %v703 = vld [vmem:[%s455 + $0xd8] sm:$0xff]
        %v704 = vld [vmem:[%s455 + $0xe0] sm:$0xff]
        %v705 = vld [vmem:[%s455 + $0xe8] sm:$0xff]
        %v706 = vld [vmem:[%s455 + $0xf0] sm:$0xff]
        %v707 = vld [vmem:[%s455 + $0xf8] sm:$0xff]
        %v708 = vunpack.c.l.bf16 %v620
        %v709 = vunpack.c.h.bf16 %v620
        %v710 = vunpack.c.l.bf16 %v621
        %v711 = vunpack.c.h.bf16 %v621
        %v712 = vunpack.c.l.bf16 %v622
        %v713 = vunpack.c.h.bf16 %v622
        %v714 = vunpack.c.l.bf16 %v623
        %v715 = vunpack.c.h.bf16 %v623
        %v716 = vunpack.c.l.bf16 %v624
        %v717 = vunpack.c.h.bf16 %v624
        %v718 = vunpack.c.l.bf16 %v625
        %v719 = vunpack.c.h.bf16 %v625
        %v720 = vunpack.c.l.bf16 %v626
        %v721 = vunpack.c.h.bf16 %v626
        %v722 = vunpack.c.l.bf16 %v627
        %v723 = vunpack.c.h.bf16 %v627
        %v724 = vunpack.c.l.bf16 %v628
        %v725 = vunpack.c.h.bf16 %v628
        %v726 = vunpack.c.l.bf16 %v629
        %v727 = vunpack.c.h.bf16 %v629
        %v728 = vunpack.c.l.bf16 %v630
        %v729 = vunpack.c.h.bf16 %v630
        %v730 = vunpack.c.l.bf16 %v631
        %v731 = vunpack.c.h.bf16 %v631
        %v732 = vunpack.c.l.bf16 %v632
        %v733 = vunpack.c.h.bf16 %v632
        %v734 = vunpack.c.l.bf16 %v633
        %v735 = vunpack.c.h.bf16 %v633
        %v736 = vunpack.c.l.bf16 %v634
        %v737 = vunpack.c.h.bf16 %v634
        %v738 = vunpack.c.l.bf16 %v635
        %v739 = vunpack.c.h.bf16 %v635
        %v740 = vunpack.c.l.bf16 %v636
        %v741 = vunpack.c.h.bf16 %v636
        %v742 = vunpack.c.l.bf16 %v637
        %v743 = vunpack.c.h.bf16 %v637
        %v744 = vunpack.c.l.bf16 %v638
        %v745 = vunpack.c.h.bf16 %v638
        %v746 = vunpack.c.l.bf16 %v639
        %v747 = vunpack.c.h.bf16 %v639
        %v748 = vunpack.c.l.bf16 %v640
        %v749 = vunpack.c.h.bf16 %v640
        %v750 = vunpack.c.l.bf16 %v641
        %v751 = vunpack.c.h.bf16 %v641
        %v752 = vunpack.c.l.bf16 %v642
        %v753 = vunpack.c.h.bf16 %v642
        %v754 = vunpack.c.l.bf16 %v643
        %v755 = vunpack.c.h.bf16 %v643
        %v756 = vadd.f32 %v708, %v732
        %v757 = vadd.f32 %v709, %v733
        %v758 = vadd.f32 %v710, %v734
        %v759 = vadd.f32 %v711, %v735
        %v760 = vadd.f32 %v712, %v736
        %v761 = vadd.f32 %v713, %v737
        %v762 = vadd.f32 %v714, %v738
        %v763 = vadd.f32 %v715, %v739
        %v764 = vadd.f32 %v716, %v740
        %v765 = vadd.f32 %v717, %v741
        %v766 = vadd.f32 %v718, %v742
        %v767 = vadd.f32 %v719, %v743
        %v768 = vadd.f32 %v720, %v744
        %v769 = vadd.f32 %v721, %v745
        %v770 = vadd.f32 %v722, %v746
        %v771 = vadd.f32 %v723, %v747
        %v772 = vadd.f32 %v724, %v748
        %v773 = vadd.f32 %v725, %v749
        %v774 = vadd.f32 %v726, %v750
        %v775 = vadd.f32 %v727, %v751
        %v776 = vadd.f32 %v728, %v752
        %v777 = vadd.f32 %v729, %v753
        %v778 = vadd.f32 %v730, %v754
        %v779 = vadd.f32 %v731, %v755
        %v780 = vpack.c.bf16 %v758, %v756
        %v781 = vpack.c.bf16 %v759, %v757
        %v782 = vpack.c.bf16 %v762, %v760
        %v783 = vpack.c.bf16 %v763, %v761
        %v784 = vpack.c.bf16 %v766, %v764
        %v785 = vpack.c.bf16 %v767, %v765
        %v786 = vpack.c.bf16 %v770, %v768
        %v787 = vpack.c.bf16 %v771, %v769
        %v788 = vpack.c.bf16 %v774, %v772
        %v789 = vpack.c.bf16 %v775, %v773
        %v790 = vpack.c.bf16 %v778, %v776
        %v791 = vpack.c.bf16 %v779, %v777
        %v792 = vunpack.c.l.bf16 %v644
        %v793 = vunpack.c.h.bf16 %v644
        %v794 = vunpack.c.l.bf16 %v645
        %v795 = vunpack.c.h.bf16 %v645
        %v796 = vunpack.c.l.bf16 %v646
        %v797 = vunpack.c.h.bf16 %v646
        %v798 = vunpack.c.l.bf16 %v647
        %v799 = vunpack.c.h.bf16 %v647
        %v800 = vunpack.c.l.bf16 %v648
        %v801 = vunpack.c.h.bf16 %v648
        %v802 = vunpack.c.l.bf16 %v649
        %v803 = vunpack.c.h.bf16 %v649
        %v804 = vunpack.c.l.bf16 %v650
        %v805 = vunpack.c.h.bf16 %v650
        %v806 = vunpack.c.l.bf16 %v651
        %v807 = vunpack.c.h.bf16 %v651
        %v808 = vunpack.c.l.bf16 %v652
        %v809 = vunpack.c.h.bf16 %v652
        %v810 = vunpack.c.l.bf16 %v653
        %v811 = vunpack.c.h.bf16 %v653
        %v812 = vunpack.c.l.bf16 %v654
        %v813 = vunpack.c.h.bf16 %v654
        %v814 = vunpack.c.l.bf16 %v655
        %v815 = vunpack.c.h.bf16 %v655
        %v816 = vunpack.c.l.bf16 %v656
        %v817 = vunpack.c.h.bf16 %v656
        %v818 = vunpack.c.l.bf16 %v657
        %v819 = vunpack.c.h.bf16 %v657
        %v820 = vunpack.c.l.bf16 %v658
        %v821 = vunpack.c.h.bf16 %v658
        %v822 = vunpack.c.l.bf16 %v659
        %v823 = vunpack.c.h.bf16 %v659
        %v824 = vunpack.c.l.bf16 %v660
        %v825 = vunpack.c.h.bf16 %v660
        %v826 = vunpack.c.l.bf16 %v661
        %v827 = vunpack.c.h.bf16 %v661
        %v828 = vunpack.c.l.bf16 %v662
        %v829 = vunpack.c.h.bf16 %v662
        %v830 = vunpack.c.l.bf16 %v663
        %v831 = vunpack.c.h.bf16 %v663
        %v832 = vunpack.c.l.bf16 %v664
        %v833 = vunpack.c.h.bf16 %v664
        %v834 = vunpack.c.l.bf16 %v665
        %v835 = vunpack.c.h.bf16 %v665
        %v836 = vunpack.c.l.bf16 %v666
        %v837 = vunpack.c.h.bf16 %v666
        %v838 = vunpack.c.l.bf16 %v667
        %v839 = vunpack.c.h.bf16 %v667
        %v840 = vunpack.c.l.bf16 %v668
        %v841 = vunpack.c.h.bf16 %v668
        %v842 = vunpack.c.l.bf16 %v669
        %v843 = vunpack.c.h.bf16 %v669
        %v844 = vunpack.c.l.bf16 %v670
        %v845 = vunpack.c.h.bf16 %v670
        %v846 = vunpack.c.l.bf16 %v671
        %v847 = vunpack.c.h.bf16 %v671
        %v848 = vunpack.c.l.bf16 %v672
        %v849 = vunpack.c.h.bf16 %v672
        %v850 = vunpack.c.l.bf16 %v673
        %v851 = vunpack.c.h.bf16 %v673
        %v852 = vunpack.c.l.bf16 %v674
        %v853 = vunpack.c.h.bf16 %v674
        %v854 = vunpack.c.l.bf16 %v675
        %v855 = vunpack.c.h.bf16 %v675
        %v856 = vunpack.c.l.bf16 %v676
        %v857 = vunpack.c.h.bf16 %v676
        %v858 = vunpack.c.l.bf16 %v677
        %v859 = vunpack.c.h.bf16 %v677
        %v860 = vunpack.c.l.bf16 %v678
        %v861 = vunpack.c.h.bf16 %v678
        %v862 = vunpack.c.l.bf16 %v679
        %v863 = vunpack.c.h.bf16 %v679
        %v864 = vunpack.c.l.bf16 %v680
        %v865 = vunpack.c.h.bf16 %v680
        %v866 = vunpack.c.l.bf16 %v681
        %v867 = vunpack.c.h.bf16 %v681
        %v868 = vunpack.c.l.bf16 %v682
        %v869 = vunpack.c.h.bf16 %v682
        %v870 = vunpack.c.l.bf16 %v683
        %v871 = vunpack.c.h.bf16 %v683
        %v872 = vunpack.c.l.bf16 %v684
        %v873 = vunpack.c.h.bf16 %v684
        %v874 = vunpack.c.l.bf16 %v685
        %v875 = vunpack.c.h.bf16 %v685
        %v876 = vunpack.c.l.bf16 %v686
        %v877 = vunpack.c.h.bf16 %v686
        %v878 = vunpack.c.l.bf16 %v687
        %v879 = vunpack.c.h.bf16 %v687
        %v880 = vunpack.c.l.bf16 %v688
        %v881 = vunpack.c.h.bf16 %v688
        %v882 = vunpack.c.l.bf16 %v689
        %v883 = vunpack.c.h.bf16 %v689
        %v884 = vunpack.c.l.bf16 %v690
        %v885 = vunpack.c.h.bf16 %v690
        %v886 = vunpack.c.l.bf16 %v691
        %v887 = vunpack.c.h.bf16 %v691
        %v888 = vunpack.c.l.bf16 %v692
        %v889 = vunpack.c.h.bf16 %v692
        %v890 = vunpack.c.l.bf16 %v693
        %v891 = vunpack.c.h.bf16 %v693
        %v892 = vunpack.c.l.bf16 %v694
        %v893 = vunpack.c.h.bf16 %v694
        %v894 = vunpack.c.l.bf16 %v695
        %v895 = vunpack.c.h.bf16 %v695
        %v896 = vunpack.c.l.bf16 %v696
        %v897 = vunpack.c.h.bf16 %v696
        %v898 = vunpack.c.l.bf16 %v697
        %v899 = vunpack.c.h.bf16 %v697
        %v900 = vunpack.c.l.bf16 %v698
        %v901 = vunpack.c.h.bf16 %v698
        %v902 = vunpack.c.l.bf16 %v699
        %v903 = vunpack.c.h.bf16 %v699
        %v904 = vunpack.c.l.bf16 %v700
        %v905 = vunpack.c.h.bf16 %v700
        %v906 = vunpack.c.l.bf16 %v701
        %v907 = vunpack.c.h.bf16 %v701
        %v908 = vunpack.c.l.bf16 %v702
        %v909 = vunpack.c.h.bf16 %v702
        %v910 = vunpack.c.l.bf16 %v703
        %v911 = vunpack.c.h.bf16 %v703
        %v912 = vunpack.c.l.bf16 %v704
        %v913 = vunpack.c.h.bf16 %v704
        %v914 = vunpack.c.l.bf16 %v705
        %v915 = vunpack.c.h.bf16 %v705
        %v916 = vunpack.c.l.bf16 %v706
        %v917 = vunpack.c.h.bf16 %v706
        %v918 = vunpack.c.l.bf16 %v707
        %v919 = vunpack.c.h.bf16 %v707
        %v920 = vadd.f32 %v792, %v856
        %v921 = vadd.f32 %v793, %v857
        %v922 = vadd.f32 %v794, %v858
        %v923 = vadd.f32 %v795, %v859
        %v924 = vadd.f32 %v796, %v860
        %v925 = vadd.f32 %v797, %v861
        %v926 = vadd.f32 %v798, %v862
        %v927 = vadd.f32 %v799, %v863
        %v928 = vadd.f32 %v800, %v864
        %v929 = vadd.f32 %v801, %v865
        %v930 = vadd.f32 %v802, %v866
        %v931 = vadd.f32 %v803, %v867
        %v932 = vadd.f32 %v804, %v868
        %v933 = vadd.f32 %v805, %v869
        %v934 = vadd.f32 %v806, %v870
        %v935 = vadd.f32 %v807, %v871
        %v936 = vadd.f32 %v808, %v872
        %v937 = vadd.f32 %v809, %v873
        %v938 = vadd.f32 %v810, %v874
        %v939 = vadd.f32 %v811, %v875
        %v940 = vadd.f32 %v812, %v876
        %v941 = vadd.f32 %v813, %v877
        %v942 = vadd.f32 %v814, %v878
        %v943 = vadd.f32 %v815, %v879
        %v944 = vadd.f32 %v816, %v880
        %v945 = vadd.f32 %v817, %v881
        %v946 = vadd.f32 %v818, %v882
        %v947 = vadd.f32 %v819, %v883
        %v948 = vadd.f32 %v820, %v884
        %v949 = vadd.f32 %v821, %v885
        %v950 = vadd.f32 %v822, %v886
        %v951 = vadd.f32 %v823, %v887
        %v952 = vadd.f32 %v824, %v888
        %v953 = vadd.f32 %v825, %v889
        %v954 = vadd.f32 %v826, %v890
        %v955 = vadd.f32 %v827, %v891
        %v956 = vadd.f32 %v828, %v892
        %v957 = vadd.f32 %v829, %v893
        %v958 = vadd.f32 %v830, %v894
        %v959 = vadd.f32 %v831, %v895
        %v960 = vadd.f32 %v832, %v896
        %v961 = vadd.f32 %v833, %v897
        %v962 = vadd.f32 %v834, %v898
        %v963 = vadd.f32 %v835, %v899
        %v964 = vadd.f32 %v836, %v900
        %v965 = vadd.f32 %v837, %v901
        %v966 = vadd.f32 %v838, %v902
        %v967 = vadd.f32 %v839, %v903
        %v968 = vadd.f32 %v840, %v904
        %v969 = vadd.f32 %v841, %v905
        %v970 = vadd.f32 %v842, %v906
        %v971 = vadd.f32 %v843, %v907
        %v972 = vadd.f32 %v844, %v908
        %v973 = vadd.f32 %v845, %v909
        %v974 = vadd.f32 %v846, %v910
        %v975 = vadd.f32 %v847, %v911
        %v976 = vadd.f32 %v848, %v912
        %v977 = vadd.f32 %v849, %v913
        %v978 = vadd.f32 %v850, %v914
        %v979 = vadd.f32 %v851, %v915
        %v980 = vadd.f32 %v852, %v916
        %v981 = vadd.f32 %v853, %v917
        %v982 = vadd.f32 %v854, %v918
        %v983 = vadd.f32 %v855, %v919
        %v984 = vpack.c.bf16 %v922, %v920
        %v985 = vpack.c.bf16 %v923, %v921
        %v986 = vpack.c.bf16 %v926, %v924
        %v987 = vpack.c.bf16 %v927, %v925
        %v988 = vpack.c.bf16 %v930, %v928
        %v989 = vpack.c.bf16 %v931, %v929
        %v990 = vpack.c.bf16 %v934, %v932
        %v991 = vpack.c.bf16 %v935, %v933
        %v992 = vpack.c.bf16 %v938, %v936
        %v993 = vpack.c.bf16 %v939, %v937
        %v994 = vpack.c.bf16 %v942, %v940
        %v995 = vpack.c.bf16 %v943, %v941
        %v996 = vpack.c.bf16 %v946, %v944
        %v997 = vpack.c.bf16 %v947, %v945
        %v998 = vpack.c.bf16 %v950, %v948
        %v999 = vpack.c.bf16 %v951, %v949
        %v1000 = vpack.c.bf16 %v954, %v952
        %v1001 = vpack.c.bf16 %v955, %v953
        %v1002 = vpack.c.bf16 %v958, %v956
        %v1003 = vpack.c.bf16 %v959, %v957
        %v1004 = vpack.c.bf16 %v962, %v960
        %v1005 = vpack.c.bf16 %v963, %v961
        %v1006 = vpack.c.bf16 %v966, %v964
        %v1007 = vpack.c.bf16 %v967, %v965
        %v1008 = vpack.c.bf16 %v970, %v968
        %v1009 = vpack.c.bf16 %v971, %v969
        %v1010 = vpack.c.bf16 %v974, %v972
        %v1011 = vpack.c.bf16 %v975, %v973
        %v1012 = vpack.c.bf16 %v978, %v976
        %v1013 = vpack.c.bf16 %v979, %v977
        %v1014 = vpack.c.bf16 %v982, %v980
        %v1015 = vpack.c.bf16 %v983, %v981
        %v1016 = vld [vmem:[#allocation2] sm:$0xff]
        %v1017 = vld [vmem:[#allocation2 + $0x8] sm:$0xff]
        %v1018 = vld [vmem:[#allocation2 + $0x10] sm:$0xff]
        %v1019 = vld [vmem:[#allocation2 + $0x18] sm:$0xff]
        %v1020 = vld [vmem:[#allocation2 + $0x20] sm:$0xff]
        %v1021 = vld [vmem:[#allocation2 + $0x28] sm:$0xff]
        %v1022 = vld [vmem:[#allocation2 + $0x30] sm:$0xff]
        %v1023 = vld [vmem:[#allocation2 + $0x38] sm:$0xff]
        %v1024 = vld [vmem:[#allocation2 + $0x40] sm:$0xff]
        %v1025 = vld [vmem:[#allocation2 + $0x48] sm:$0xff]
        %v1026 = vld [vmem:[#allocation2 + $0x50] sm:$0xff]
        %v1027 = vld [vmem:[#allocation2 + $0x58] sm:$0xff]
        %v1028 = vld [vmem:[#allocation2 + $0x60] sm:$0xff]
        %v1029 = vld [vmem:[#allocation2 + $0x68] sm:$0xff]
        %v1030 = vld [vmem:[#allocation2 + $0x70] sm:$0xff]
        %v1031 = vld [vmem:[#allocation2 + $0x78] sm:$0xff]
        %v1032 = vld [vmem:[#allocation2 + $0x80] sm:$0xff]
        %v1033 = vld [vmem:[#allocation2 + $0x88] sm:$0xff]
        %v1034 = vld [vmem:[#allocation2 + $0x90] sm:$0xff]
        %v1035 = vld [vmem:[#allocation2 + $0x98] sm:$0xff]
        %v1036 = vld [vmem:[#allocation2 + $0xa0] sm:$0xff]
        %v1037 = vld [vmem:[#allocation2 + $0xa8] sm:$0xff]
        %v1038 = vld [vmem:[#allocation2 + $0xb0] sm:$0xff]
        %v1039 = vld [vmem:[#allocation2 + $0xb8] sm:$0xff]
        %v1052 = vunpack.c.l.b16 %v620
        %v1053 = vunpack.c.h.b16 %v620
        %v1054 = vunpack.c.l.b16 %v621
        %v1055 = vunpack.c.h.b16 %v621
        %v1056 = vunpack.c.l.b16 %v622
        %v1057 = vunpack.c.h.b16 %v622
        %v1058 = vunpack.c.l.b16 %v623
        %v1059 = vunpack.c.h.b16 %v623
        %v1060 = vunpack.c.l.b16 %v624
        %v1061 = vunpack.c.h.b16 %v624
        %v1062 = vunpack.c.l.b16 %v625
        %v1063 = vunpack.c.h.b16 %v625
        %v1064 = vunpack.c.l.b16 %v626
        %v1065 = vunpack.c.h.b16 %v626
        %v1066 = vunpack.c.l.b16 %v627
        %v1067 = vunpack.c.h.b16 %v627
        %v1068 = vunpack.c.l.b16 %v628
        %v1069 = vunpack.c.h.b16 %v628
        %v1070 = vunpack.c.l.b16 %v629
        %v1071 = vunpack.c.h.b16 %v629
        %v1072 = vunpack.c.l.b16 %v630
        %v1073 = vunpack.c.h.b16 %v630
        %v1074 = vunpack.c.l.b16 %v631
        %v1075 = vunpack.c.h.b16 %v631
        %v1076 = vpack.c.b16 %v1054, %v1052
        %v1077 = vpack.c.b16 %v1055, %v1053
        %v1078 = vpack.c.b16 %v1058, %v1056
        %v1079 = vpack.c.b16 %v1059, %v1057
        %v1080 = vpack.c.b16 %v1062, %v1060
        %v1081 = vpack.c.b16 %v1063, %v1061
        %v1082 = vpack.c.b16 %v1066, %v1064
        %v1083 = vpack.c.b16 %v1067, %v1065
        %v1084 = vpack.c.b16 %v1070, %v1068
        %v1085 = vpack.c.b16 %v1071, %v1069
        %v1086 = vpack.c.b16 %v1074, %v1072
        %v1087 = vpack.c.b16 %v1075, %v1073
        %v1132 = vunpack.c.l.b16 %v644
        %v1133 = vunpack.c.h.b16 %v644
        %v1134 = vunpack.c.l.b16 %v645
        %v1135 = vunpack.c.h.b16 %v645
        %v1136 = vunpack.c.l.b16 %v646
        %v1137 = vunpack.c.h.b16 %v646
        %v1138 = vunpack.c.l.b16 %v647
        %v1139 = vunpack.c.h.b16 %v647
        %v1140 = vunpack.c.l.b16 %v648
        %v1141 = vunpack.c.h.b16 %v648
        %v1142 = vunpack.c.l.b16 %v649
        %v1143 = vunpack.c.h.b16 %v649
        %v1144 = vunpack.c.l.b16 %v650
        %v1145 = vunpack.c.h.b16 %v650
        %v1146 = vunpack.c.l.b16 %v651
        %v1147 = vunpack.c.h.b16 %v651
        %v1148 = vunpack.c.l.b16 %v652
        %v1149 = vunpack.c.h.b16 %v652
        %v1150 = vunpack.c.l.b16 %v653
        %v1151 = vunpack.c.h.b16 %v653
        %v1152 = vunpack.c.l.b16 %v654
        %v1153 = vunpack.c.h.b16 %v654
        %v1154 = vunpack.c.l.b16 %v655
        %v1155 = vunpack.c.h.b16 %v655
        %v1156 = vunpack.c.l.b16 %v656
        %v1157 = vunpack.c.h.b16 %v656
        %v1158 = vunpack.c.l.b16 %v657
        %v1159 = vunpack.c.h.b16 %v657
        %v1160 = vunpack.c.l.b16 %v658
        %v1161 = vunpack.c.h.b16 %v658
        %v1162 = vunpack.c.l.b16 %v659
        %v1163 = vunpack.c.h.b16 %v659
        %v1164 = vunpack.c.l.b16 %v660
        %v1165 = vunpack.c.h.b16 %v660
        %v1166 = vunpack.c.l.b16 %v661
        %v1167 = vunpack.c.h.b16 %v661
        %v1168 = vunpack.c.l.b16 %v662
        %v1169 = vunpack.c.h.b16 %v662
        %v1170 = vunpack.c.l.b16 %v663
        %v1171 = vunpack.c.h.b16 %v663
        %v1172 = vunpack.c.l.b16 %v664
        %v1173 = vunpack.c.h.b16 %v664
        %v1174 = vunpack.c.l.b16 %v665
        %v1175 = vunpack.c.h.b16 %v665
        %v1176 = vunpack.c.l.b16 %v666
        %v1177 = vunpack.c.h.b16 %v666
        %v1178 = vunpack.c.l.b16 %v667
        %v1179 = vunpack.c.h.b16 %v667
        %v1180 = vunpack.c.l.b16 %v668
        %v1181 = vunpack.c.h.b16 %v668
        %v1182 = vunpack.c.l.b16 %v669
        %v1183 = vunpack.c.h.b16 %v669
        %v1184 = vunpack.c.l.b16 %v670
        %v1185 = vunpack.c.h.b16 %v670
        %v1186 = vunpack.c.l.b16 %v671
        %v1187 = vunpack.c.h.b16 %v671
        %v1188 = vunpack.c.l.b16 %v672
        %v1189 = vunpack.c.h.b16 %v672
        %v1190 = vunpack.c.l.b16 %v673
        %v1191 = vunpack.c.h.b16 %v673
        %v1192 = vunpack.c.l.b16 %v674
        %v1193 = vunpack.c.h.b16 %v674
        %v1194 = vunpack.c.l.b16 %v675
        %v1195 = vunpack.c.h.b16 %v675
        %v1196 = vpack.c.b16 %v1134, %v1132
        %v1197 = vpack.c.b16 %v1135, %v1133
        %v1198 = vpack.c.b16 %v1138, %v1136
        %v1199 = vpack.c.b16 %v1139, %v1137
        %v1200 = vpack.c.b16 %v1142, %v1140
        %v1201 = vpack.c.b16 %v1143, %v1141
        %v1202 = vpack.c.b16 %v1146, %v1144
        %v1203 = vpack.c.b16 %v1147, %v1145
        %v1204 = vpack.c.b16 %v1150, %v1148
        %v1205 = vpack.c.b16 %v1151, %v1149
        %v1206 = vpack.c.b16 %v1154, %v1152
        %v1207 = vpack.c.b16 %v1155, %v1153
        %v1208 = vpack.c.b16 %v1158, %v1156
        %v1209 = vpack.c.b16 %v1159, %v1157
        %v1210 = vpack.c.b16 %v1162, %v1160
        %v1211 = vpack.c.b16 %v1163, %v1161
        %v1212 = vpack.c.b16 %v1166, %v1164
        %v1213 = vpack.c.b16 %v1167, %v1165
        %v1214 = vpack.c.b16 %v1170, %v1168
        %v1215 = vpack.c.b16 %v1171, %v1169
        %v1216 = vpack.c.b16 %v1174, %v1172
        %v1217 = vpack.c.b16 %v1175, %v1173
        %v1218 = vpack.c.b16 %v1178, %v1176
        %v1219 = vpack.c.b16 %v1179, %v1177
        %v1220 = vpack.c.b16 %v1182, %v1180
        %v1221 = vpack.c.b16 %v1183, %v1181
        %v1222 = vpack.c.b16 %v1186, %v1184
        %v1223 = vpack.c.b16 %v1187, %v1185
        %v1224 = vpack.c.b16 %v1190, %v1188
        %v1225 = vpack.c.b16 %v1191, %v1189
        %v1226 = vpack.c.b16 %v1194, %v1192
        %v1227 = vpack.c.b16 %v1195, %v1193
        %1260 = vmatpush.bf16.msra.mxu0 %v1210
        %1261 = vmatpush.bf16.msra.mxu0 %v1208
        %1262 = vmatpush.bf16.msra.mxu0 %v1206
        %1263 = vmatpush.bf16.msra.mxu0 %v1204
        %1264 = vmatpush.bf16.msra.mxu0 %v1202
        %1265 = vmatpush.bf16.msra.mxu0 %v1200
        %1266 = vmatpush.bf16.msra.mxu0 %v1198
        %1267 = vmatpush.bf16.msra.mxu0 %v1196
        %1268 = vmatmul.bf16.gmra.mxu0 %v1076
        %v1269 = vpop.f32.mrf.mxu0
        %v1270 = vadd.f32 0.0, %v1269
        %v1271 = vpop.f32.mrf.mxu0
        %v1272 = vadd.f32 0.0, %v1271
        %1273 = vmatmul.bf16.gmra.mxu0 %v1078
        %v1274 = vpop.f32.mrf.mxu0
        %v1275 = vadd.f32 0.0, %v1274
        %v1276 = vpop.f32.mrf.mxu0
        %v1277 = vadd.f32 0.0, %v1276
        %1278 = vmatmul.bf16.gmra.mxu0 %v1080
        %v1279 = vpop.f32.mrf.mxu0
        %v1280 = vadd.f32 0.0, %v1279
        %v1281 = vpop.f32.mrf.mxu0
        %v1282 = vadd.f32 0.0, %v1281
        %1283 = vmatmul.bf16.gmra.mxu0 %v1082
        %v1284 = vpop.f32.mrf.mxu0
        %v1285 = vadd.f32 0.0, %v1284
        %v1286 = vpop.f32.mrf.mxu0
        %v1287 = vadd.f32 0.0, %v1286
        %1288 = vmatmul.bf16.gmra.mxu0 %v1084
        %v1289 = vpop.f32.mrf.mxu0
        %v1290 = vadd.f32 0.0, %v1289
        %v1291 = vpop.f32.mrf.mxu0
        %v1292 = vadd.f32 0.0, %v1291
        %1293 = vmatmul.bf16.gmra.mxu0 %v1086
        %v1294 = vpop.f32.mrf.mxu0
        %v1295 = vadd.f32 0.0, %v1294
        %v1296 = vpop.f32.mrf.mxu0
        %v1297 = vadd.f32 0.0, %v1296
        %1298 = vdwg.mxu0
        %1299 = vmatpush.bf16.msra.mxu0 %v1226
        %1300 = vmatpush.bf16.msra.mxu0 %v1224
        %1301 = vmatpush.bf16.msra.mxu0 %v1222
        %1302 = vmatpush.bf16.msra.mxu0 %v1220
        %1303 = vmatpush.bf16.msra.mxu0 %v1218
        %1304 = vmatpush.bf16.msra.mxu0 %v1216
        %1305 = vmatpush.bf16.msra.mxu0 %v1214
        %1306 = vmatpush.bf16.msra.mxu0 %v1212
        %1307 = vmatmul.bf16.gmra.mxu0 %v1077
        %v1308 = vpop.f32.mrf.mxu0
        %v1309 = vadd.f32 %v1270, %v1308
        %v1310 = vpop.f32.mrf.mxu0
        %v1311 = vadd.f32 %v1272, %v1310
        %1312 = vmatmul.bf16.gmra.mxu0 %v1079
        %v1313 = vpop.f32.mrf.mxu0
        %v1314 = vadd.f32 %v1275, %v1313
        %v1315 = vpop.f32.mrf.mxu0
        %v1316 = vadd.f32 %v1277, %v1315
        %1317 = vmatmul.bf16.gmra.mxu0 %v1081
        %v1318 = vpop.f32.mrf.mxu0
        %v1319 = vadd.f32 %v1280, %v1318
        %v1320 = vpop.f32.mrf.mxu0
        %v1321 = vadd.f32 %v1282, %v1320
        %1322 = vmatmul.bf16.gmra.mxu0 %v1083
        %v1323 = vpop.f32.mrf.mxu0
        %v1324 = vadd.f32 %v1285, %v1323
        %v1325 = vpop.f32.mrf.mxu0
        %v1326 = vadd.f32 %v1287, %v1325
        %1327 = vmatmul.bf16.gmra.mxu0 %v1085
        %v1328 = vpop.f32.mrf.mxu0
        %v1329 = vadd.f32 %v1290, %v1328
        %v1330 = vpop.f32.mrf.mxu0
        %v1331 = vadd.f32 %v1292, %v1330
        %1332 = vmatmul.bf16.gmra.mxu0 %v1087
        %v1333 = vpop.f32.mrf.mxu0
        %v1334 = vadd.f32 %v1295, %v1333
        %v1335 = vpop.f32.mrf.mxu0
        %v1336 = vadd.f32 %v1297, %v1335
        %1337 = vdwg.mxu0
        %1338 = vmatpush.bf16.msra.mxu0 %v1211
        %1339 = vmatpush.bf16.msra.mxu0 %v1209
        %1340 = vmatpush.bf16.msra.mxu0 %v1207
        %1341 = vmatpush.bf16.msra.mxu0 %v1205
        %1342 = vmatpush.bf16.msra.mxu0 %v1203
        %1343 = vmatpush.bf16.msra.mxu0 %v1201
        %1344 = vmatpush.bf16.msra.mxu0 %v1199
        %1345 = vmatpush.bf16.msra.mxu0 %v1197
        %1346 = vmatmul.bf16.gmra.mxu0 %v1076
        %v1347 = vpop.f32.mrf.mxu0
        %v1348 = vadd.f32 0.0, %v1347
        %v1349 = vpop.f32.mrf.mxu0
        %v1350 = vadd.f32 0.0, %v1349
        %1351 = vmatmul.bf16.gmra.mxu0 %v1078
        %v1352 = vpop.f32.mrf.mxu0
        %v1353 = vadd.f32 0.0, %v1352
        %v1354 = vpop.f32.mrf.mxu0
        %v1355 = vadd.f32 0.0, %v1354
        %1356 = vmatmul.bf16.gmra.mxu0 %v1080
        %v1357 = vpop.f32.mrf.mxu0
        %v1358 = vadd.f32 0.0, %v1357
        %v1359 = vpop.f32.mrf.mxu0
        %v1360 = vadd.f32 0.0, %v1359
        %1361 = vmatmul.bf16.gmra.mxu0 %v1082
        %v1362 = vpop.f32.mrf.mxu0
        %v1363 = vadd.f32 0.0, %v1362
        %v1364 = vpop.f32.mrf.mxu0
        %v1365 = vadd.f32 0.0, %v1364
        %1366 = vmatmul.bf16.gmra.mxu0 %v1084
        %v1367 = vpop.f32.mrf.mxu0
        %v1368 = vadd.f32 0.0, %v1367
        %v1369 = vpop.f32.mrf.mxu0
        %v1370 = vadd.f32 0.0, %v1369
        %1371 = vmatmul.bf16.gmra.mxu0 %v1086
        %v1372 = vpop.f32.mrf.mxu0
        %v1373 = vadd.f32 0.0, %v1372
        %v1374 = vpop.f32.mrf.mxu0
        %v1375 = vadd.f32 0.0, %v1374
        %1376 = vdwg.mxu0
        %1377 = vmatpush.bf16.msra.mxu0 %v1227
        %1378 = vmatpush.bf16.msra.mxu0 %v1225
        %1379 = vmatpush.bf16.msra.mxu0 %v1223
        %1380 = vmatpush.bf16.msra.mxu0 %v1221
        %1381 = vmatpush.bf16.msra.mxu0 %v1219
        %1382 = vmatpush.bf16.msra.mxu0 %v1217
        %1383 = vmatpush.bf16.msra.mxu0 %v1215
        %1384 = vmatpush.bf16.msra.mxu0 %v1213
        %1385 = vmatmul.bf16.gmra.mxu0 %v1077
        %v1386 = vpop.f32.mrf.mxu0
        %v1387 = vadd.f32 %v1348, %v1386
        %v1388 = vpop.f32.mrf.mxu0
        %v1389 = vadd.f32 %v1350, %v1388
        %1390 = vmatmul.bf16.gmra.mxu0 %v1079
        %v1391 = vpop.f32.mrf.mxu0
        %v1392 = vadd.f32 %v1353, %v1391
        %v1393 = vpop.f32.mrf.mxu0
        %v1394 = vadd.f32 %v1355, %v1393
        %1395 = vmatmul.bf16.gmra.mxu0 %v1081
        %v1396 = vpop.f32.mrf.mxu0
        %v1397 = vadd.f32 %v1358, %v1396
        %v1398 = vpop.f32.mrf.mxu0
        %v1399 = vadd.f32 %v1360, %v1398
        %1400 = vmatmul.bf16.gmra.mxu0 %v1083
        %v1401 = vpop.f32.mrf.mxu0
        %v1402 = vadd.f32 %v1363, %v1401
        %v1403 = vpop.f32.mrf.mxu0
        %v1404 = vadd.f32 %v1365, %v1403
        %1405 = vmatmul.bf16.gmra.mxu0 %v1085
        %v1406 = vpop.f32.mrf.mxu0
        %v1407 = vadd.f32 %v1368, %v1406
        %v1408 = vpop.f32.mrf.mxu0
        %v1409 = vadd.f32 %v1370, %v1408
        %1410 = vmatmul.bf16.gmra.mxu0 %v1087
        %v1411 = vpop.f32.mrf.mxu0
        %v1412 = vadd.f32 %v1373, %v1411
        %v1413 = vpop.f32.mrf.mxu0
        %v1414 = vadd.f32 %v1375, %v1413
        %1415 = vdwg.mxu0
        %v1416 = vadd.f32 %v1016, %v1309
        %v1417 = vadd.f32 %v1017, %v1387
        %v1418 = vadd.f32 %v1018, %v1311
        %v1419 = vadd.f32 %v1019, %v1389
        %v1420 = vadd.f32 %v1020, %v1314
        %v1421 = vadd.f32 %v1021, %v1392
        %v1422 = vadd.f32 %v1022, %v1316
        %v1423 = vadd.f32 %v1023, %v1394
        %v1424 = vadd.f32 %v1024, %v1319
        %v1425 = vadd.f32 %v1025, %v1397
        %v1426 = vadd.f32 %v1026, %v1321
        %v1427 = vadd.f32 %v1027, %v1399
        %v1428 = vadd.f32 %v1028, %v1324
        %v1429 = vadd.f32 %v1029, %v1402
        %v1430 = vadd.f32 %v1030, %v1326
        %v1431 = vadd.f32 %v1031, %v1404
        %v1432 = vadd.f32 %v1032, %v1329
        %v1433 = vadd.f32 %v1033, %v1407
        %v1434 = vadd.f32 %v1034, %v1331
        %v1435 = vadd.f32 %v1035, %v1409
        %v1436 = vadd.f32 %v1036, %v1334
        %v1437 = vadd.f32 %v1037, %v1412
        %v1438 = vadd.f32 %v1038, %v1336
        %v1439 = vadd.f32 %v1039, %v1414
        %1440 = vst [vmem:[#allocation2] sm:$0xff] %v1416
        %1441 = vst [vmem:[#allocation2 + $0x8] sm:$0xff] %v1417
        %1442 = vst [vmem:[#allocation2 + $0x10] sm:$0xff] %v1418
        %1443 = vst [vmem:[#allocation2 + $0x18] sm:$0xff] %v1419
        %1444 = vst [vmem:[#allocation2 + $0x20] sm:$0xff] %v1420
        %1445 = vst [vmem:[#allocation2 + $0x28] sm:$0xff] %v1421
        %1446 = vst [vmem:[#allocation2 + $0x30] sm:$0xff] %v1422
        %1447 = vst [vmem:[#allocation2 + $0x38] sm:$0xff] %v1423
        %1448 = vst [vmem:[#allocation2 + $0x40] sm:$0xff] %v1424
        %1449 = vst [vmem:[#allocation2 + $0x48] sm:$0xff] %v1425
        %1450 = vst [vmem:[#allocation2 + $0x50] sm:$0xff] %v1426
        %1451 = vst [vmem:[#allocation2 + $0x58] sm:$0xff] %v1427
        %1452 = vst [vmem:[#allocation2 + $0x60] sm:$0xff] %v1428
        %1453 = vst [vmem:[#allocation2 + $0x68] sm:$0xff] %v1429
        %1454 = vst [vmem:[#allocation2 + $0x70] sm:$0xff] %v1430
        %1455 = vst [vmem:[#allocation2 + $0x78] sm:$0xff] %v1431
        %1456 = vst [vmem:[#allocation2 + $0x80] sm:$0xff] %v1432
        %1457 = vst [vmem:[#allocation2 + $0x88] sm:$0xff] %v1433
        %1458 = vst [vmem:[#allocation2 + $0x90] sm:$0xff] %v1434
        %1459 = vst [vmem:[#allocation2 + $0x98] sm:$0xff] %v1435
        %1460 = vst [vmem:[#allocation2 + $0xa0] sm:$0xff] %v1436
        %1461 = vst [vmem:[#allocation2 + $0xa8] sm:$0xff] %v1437
        %1462 = vst [vmem:[#allocation2 + $0xb0] sm:$0xff] %v1438
        %1463 = vst [vmem:[#allocation2 + $0xb8] sm:$0xff] %v1439
        %v1464 = vld [vmem:[#allocation3] sm:$0xff]
        %v1465 = vld [vmem:[#allocation3 + $0x8] sm:$0xff]
        %v1466 = vld [vmem:[#allocation3 + $0x10] sm:$0xff]
        %v1467 = vld [vmem:[#allocation3 + $0x18] sm:$0xff]
        %v1468 = vld [vmem:[#allocation3 + $0x20] sm:$0xff]
        %v1469 = vld [vmem:[#allocation3 + $0x28] sm:$0xff]
        %v1470 = vld [vmem:[#allocation3 + $0x30] sm:$0xff]
        %v1471 = vld [vmem:[#allocation3 + $0x38] sm:$0xff]
        %v1472 = vld [vmem:[#allocation3 + $0x40] sm:$0xff]
        %v1473 = vld [vmem:[#allocation3 + $0x48] sm:$0xff]
        %v1474 = vld [vmem:[#allocation3 + $0x50] sm:$0xff]
        %v1475 = vld [vmem:[#allocation3 + $0x58] sm:$0xff]
        %v1476 = vld [vmem:[#allocation3 + $0x60] sm:$0xff]
        %v1477 = vld [vmem:[#allocation3 + $0x68] sm:$0xff]
        %v1478 = vld [vmem:[#allocation3 + $0x70] sm:$0xff]
        %v1479 = vld [vmem:[#allocation3 + $0x78] sm:$0xff]
        %v1480 = vld [vmem:[#allocation3 + $0x80] sm:$0xff]
        %v1481 = vld [vmem:[#allocation3 + $0x88] sm:$0xff]
        %v1482 = vld [vmem:[#allocation3 + $0x90] sm:$0xff]
        %v1483 = vld [vmem:[#allocation3 + $0x98] sm:$0xff]
        %v1484 = vld [vmem:[#allocation3 + $0xa0] sm:$0xff]
        %v1485 = vld [vmem:[#allocation3 + $0xa8] sm:$0xff]
        %v1486 = vld [vmem:[#allocation3 + $0xb0] sm:$0xff]
        %v1487 = vld [vmem:[#allocation3 + $0xb8] sm:$0xff]
        %v1500 = vunpack.c.l.b16 %v632
        %v1501 = vunpack.c.h.b16 %v632
        %v1502 = vunpack.c.l.b16 %v633
        %v1503 = vunpack.c.h.b16 %v633
        %v1504 = vunpack.c.l.b16 %v634
        %v1505 = vunpack.c.h.b16 %v634
        %v1506 = vunpack.c.l.b16 %v635
        %v1507 = vunpack.c.h.b16 %v635
        %v1508 = vunpack.c.l.b16 %v636
        %v1509 = vunpack.c.h.b16 %v636
        %v1510 = vunpack.c.l.b16 %v637
        %v1511 = vunpack.c.h.b16 %v637
        %v1512 = vunpack.c.l.b16 %v638
        %v1513 = vunpack.c.h.b16 %v638
        %v1514 = vunpack.c.l.b16 %v639
        %v1515 = vunpack.c.h.b16 %v639
        %v1516 = vunpack.c.l.b16 %v640
        %v1517 = vunpack.c.h.b16 %v640
        %v1518 = vunpack.c.l.b16 %v641
        %v1519 = vunpack.c.h.b16 %v641
        %v1520 = vunpack.c.l.b16 %v642
        %v1521 = vunpack.c.h.b16 %v642
        %v1522 = vunpack.c.l.b16 %v643
        %v1523 = vunpack.c.h.b16 %v643
        %v1524 = vpack.c.b16 %v1502, %v1500
        %v1525 = vpack.c.b16 %v1503, %v1501
        %v1526 = vpack.c.b16 %v1506, %v1504
        %v1527 = vpack.c.b16 %v1507, %v1505
        %v1528 = vpack.c.b16 %v1510, %v1508
        %v1529 = vpack.c.b16 %v1511, %v1509
        %v1530 = vpack.c.b16 %v1514, %v1512
        %v1531 = vpack.c.b16 %v1515, %v1513
        %v1532 = vpack.c.b16 %v1518, %v1516
        %v1533 = vpack.c.b16 %v1519, %v1517
        %v1534 = vpack.c.b16 %v1522, %v1520
        %v1535 = vpack.c.b16 %v1523, %v1521
        %v1580 = vunpack.c.l.b16 %v676
        %v1581 = vunpack.c.h.b16 %v676
        %v1582 = vunpack.c.l.b16 %v677
        %v1583 = vunpack.c.h.b16 %v677
        %v1584 = vunpack.c.l.b16 %v678
        %v1585 = vunpack.c.h.b16 %v678
        %v1586 = vunpack.c.l.b16 %v679
        %v1587 = vunpack.c.h.b16 %v679
        %v1588 = vunpack.c.l.b16 %v680
        %v1589 = vunpack.c.h.b16 %v680
        %v1590 = vunpack.c.l.b16 %v681
        %v1591 = vunpack.c.h.b16 %v681
        %v1592 = vunpack.c.l.b16 %v682
        %v1593 = vunpack.c.h.b16 %v682
        %v1594 = vunpack.c.l.b16 %v683
        %v1595 = vunpack.c.h.b16 %v683
        %v1596 = vunpack.c.l.b16 %v684
        %v1597 = vunpack.c.h.b16 %v684
        %v1598 = vunpack.c.l.b16 %v685
        %v1599 = vunpack.c.h.b16 %v685
        %v1600 = vunpack.c.l.b16 %v686
        %v1601 = vunpack.c.h.b16 %v686
        %v1602 = vunpack.c.l.b16 %v687
        %v1603 = vunpack.c.h.b16 %v687
        %v1604 = vunpack.c.l.b16 %v688
        %v1605 = vunpack.c.h.b16 %v688
        %v1606 = vunpack.c.l.b16 %v689
        %v1607 = vunpack.c.h.b16 %v689
        %v1608 = vunpack.c.l.b16 %v690
        %v1609 = vunpack.c.h.b16 %v690
        %v1610 = vunpack.c.l.b16 %v691
        %v1611 = vunpack.c.h.b16 %v691
        %v1612 = vunpack.c.l.b16 %v692
        %v1613 = vunpack.c.h.b16 %v692
        %v1614 = vunpack.c.l.b16 %v693
        %v1615 = vunpack.c.h.b16 %v693
        %v1616 = vunpack.c.l.b16 %v694
        %v1617 = vunpack.c.h.b16 %v694
        %v1618 = vunpack.c.l.b16 %v695
        %v1619 = vunpack.c.h.b16 %v695
        %v1620 = vunpack.c.l.b16 %v696
        %v1621 = vunpack.c.h.b16 %v696
        %v1622 = vunpack.c.l.b16 %v697
        %v1623 = vunpack.c.h.b16 %v697
        %v1624 = vunpack.c.l.b16 %v698
        %v1625 = vunpack.c.h.b16 %v698
        %v1626 = vunpack.c.l.b16 %v699
        %v1627 = vunpack.c.h.b16 %v699
        %v1628 = vunpack.c.l.b16 %v700
        %v1629 = vunpack.c.h.b16 %v700
        %v1630 = vunpack.c.l.b16 %v701
        %v1631 = vunpack.c.h.b16 %v701
        %v1632 = vunpack.c.l.b16 %v702
        %v1633 = vunpack.c.h.b16 %v702
        %v1634 = vunpack.c.l.b16 %v703
        %v1635 = vunpack.c.h.b16 %v703
        %v1636 = vunpack.c.l.b16 %v704
        %v1637 = vunpack.c.h.b16 %v704
        %v1638 = vunpack.c.l.b16 %v705
        %v1639 = vunpack.c.h.b16 %v705
        %v1640 = vunpack.c.l.b16 %v706
        %v1641 = vunpack.c.h.b16 %v706
        %v1642 = vunpack.c.l.b16 %v707
        %v1643 = vunpack.c.h.b16 %v707
        %v1644 = vpack.c.b16 %v1582, %v1580
        %v1645 = vpack.c.b16 %v1583, %v1581
        %v1646 = vpack.c.b16 %v1586, %v1584
        %v1647 = vpack.c.b16 %v1587, %v1585
        %v1648 = vpack.c.b16 %v1590, %v1588
        %v1649 = vpack.c.b16 %v1591, %v1589
        %v1650 = vpack.c.b16 %v1594, %v1592
        %v1651 = vpack.c.b16 %v1595, %v1593
        %v1652 = vpack.c.b16 %v1598, %v1596
        %v1653 = vpack.c.b16 %v1599, %v1597
        %v1654 = vpack.c.b16 %v1602, %v1600
        %v1655 = vpack.c.b16 %v1603, %v1601
        %v1656 = vpack.c.b16 %v1606, %v1604
        %v1657 = vpack.c.b16 %v1607, %v1605
        %v1658 = vpack.c.b16 %v1610, %v1608
        %v1659 = vpack.c.b16 %v1611, %v1609
        %v1660 = vpack.c.b16 %v1614, %v1612
        %v1661 = vpack.c.b16 %v1615, %v1613
        %v1662 = vpack.c.b16 %v1618, %v1616
        %v1663 = vpack.c.b16 %v1619, %v1617
        %v1664 = vpack.c.b16 %v1622, %v1620
        %v1665 = vpack.c.b16 %v1623, %v1621
        %v1666 = vpack.c.b16 %v1626, %v1624
        %v1667 = vpack.c.b16 %v1627, %v1625
        %v1668 = vpack.c.b16 %v1630, %v1628
        %v1669 = vpack.c.b16 %v1631, %v1629
        %v1670 = vpack.c.b16 %v1634, %v1632
        %v1671 = vpack.c.b16 %v1635, %v1633
        %v1672 = vpack.c.b16 %v1638, %v1636
        %v1673 = vpack.c.b16 %v1639, %v1637
        %v1674 = vpack.c.b16 %v1642, %v1640
        %v1675 = vpack.c.b16 %v1643, %v1641
        %1708 = vmatpush.bf16.msra.mxu0 %v1658
        %1709 = vmatpush.bf16.msra.mxu0 %v1656
        %1710 = vmatpush.bf16.msra.mxu0 %v1654
        %1711 = vmatpush.bf16.msra.mxu0 %v1652
        %1712 = vmatpush.bf16.msra.mxu0 %v1650
        %1713 = vmatpush.bf16.msra.mxu0 %v1648
        %1714 = vmatpush.bf16.msra.mxu0 %v1646
        %1715 = vmatpush.bf16.msra.mxu0 %v1644
        %1716 = vmatmul.bf16.gmra.mxu0 %v1524
        %v1717 = vpop.f32.mrf.mxu0
        %v1718 = vadd.f32 0.0, %v1717
        %v1719 = vpop.f32.mrf.mxu0
        %v1720 = vadd.f32 0.0, %v1719
        %1721 = vmatmul.bf16.gmra.mxu0 %v1526
        %v1722 = vpop.f32.mrf.mxu0
        %v1723 = vadd.f32 0.0, %v1722
        %v1724 = vpop.f32.mrf.mxu0
        %v1725 = vadd.f32 0.0, %v1724
        %1726 = vmatmul.bf16.gmra.mxu0 %v1528
        %v1727 = vpop.f32.mrf.mxu0
        %v1728 = vadd.f32 0.0, %v1727
        %v1729 = vpop.f32.mrf.mxu0
        %v1730 = vadd.f32 0.0, %v1729
        %1731 = vmatmul.bf16.gmra.mxu0 %v1530
        %v1732 = vpop.f32.mrf.mxu0
        %v1733 = vadd.f32 0.0, %v1732
        %v1734 = vpop.f32.mrf.mxu0
        %v1735 = vadd.f32 0.0, %v1734
        %1736 = vmatmul.bf16.gmra.mxu0 %v1532
        %v1737 = vpop.f32.mrf.mxu0
        %v1738 = vadd.f32 0.0, %v1737
        %v1739 = vpop.f32.mrf.mxu0
        %v1740 = vadd.f32 0.0, %v1739
        %1741 = vmatmul.bf16.gmra.mxu0 %v1534
        %v1742 = vpop.f32.mrf.mxu0
        %v1743 = vadd.f32 0.0, %v1742
        %v1744 = vpop.f32.mrf.mxu0
        %v1745 = vadd.f32 0.0, %v1744
        %1746 = vdwg.mxu0
        %1747 = vmatpush.bf16.msra.mxu0 %v1674
        %1748 = vmatpush.bf16.msra.mxu0 %v1672
        %1749 = vmatpush.bf16.msra.mxu0 %v1670
        %1750 = vmatpush.bf16.msra.mxu0 %v1668
        %1751 = vmatpush.bf16.msra.mxu0 %v1666
        %1752 = vmatpush.bf16.msra.mxu0 %v1664
        %1753 = vmatpush.bf16.msra.mxu0 %v1662
        %1754 = vmatpush.bf16.msra.mxu0 %v1660
        %1755 = vmatmul.bf16.gmra.mxu0 %v1525
        %v1756 = vpop.f32.mrf.mxu0
        %v1757 = vadd.f32 %v1718, %v1756
        %v1758 = vpop.f32.mrf.mxu0
        %v1759 = vadd.f32 %v1720, %v1758
        %1760 = vmatmul.bf16.gmra.mxu0 %v1527
        %v1761 = vpop.f32.mrf.mxu0
        %v1762 = vadd.f32 %v1723, %v1761
        %v1763 = vpop.f32.mrf.mxu0
        %v1764 = vadd.f32 %v1725, %v1763
        %1765 = vmatmul.bf16.gmra.mxu0 %v1529
        %v1766 = vpop.f32.mrf.mxu0
        %v1767 = vadd.f32 %v1728, %v1766
        %v1768 = vpop.f32.mrf.mxu0
        %v1769 = vadd.f32 %v1730, %v1768
        %1770 = vmatmul.bf16.gmra.mxu0 %v1531
        %v1771 = vpop.f32.mrf.mxu0
        %v1772 = vadd.f32 %v1733, %v1771
        %v1773 = vpop.f32.mrf.mxu0
        %v1774 = vadd.f32 %v1735, %v1773
        %1775 = vmatmul.bf16.gmra.mxu0 %v1533
        %v1776 = vpop.f32.mrf.mxu0
        %v1777 = vadd.f32 %v1738, %v1776
        %v1778 = vpop.f32.mrf.mxu0
        %v1779 = vadd.f32 %v1740, %v1778
        %1780 = vmatmul.bf16.gmra.mxu0 %v1535
        %v1781 = vpop.f32.mrf.mxu0
        %v1782 = vadd.f32 %v1743, %v1781
        %v1783 = vpop.f32.mrf.mxu0
        %v1784 = vadd.f32 %v1745, %v1783
        %1785 = vdwg.mxu0
        %1786 = vmatpush.bf16.msra.mxu0 %v1659
        %1787 = vmatpush.bf16.msra.mxu0 %v1657
        %1788 = vmatpush.bf16.msra.mxu0 %v1655
        %1789 = vmatpush.bf16.msra.mxu0 %v1653
        %1790 = vmatpush.bf16.msra.mxu0 %v1651
        %1791 = vmatpush.bf16.msra.mxu0 %v1649
        %1792 = vmatpush.bf16.msra.mxu0 %v1647
        %1793 = vmatpush.bf16.msra.mxu0 %v1645
        %1794 = vmatmul.bf16.gmra.mxu0 %v1524
        %v1795 = vpop.f32.mrf.mxu0
        %v1796 = vadd.f32 0.0, %v1795
        %v1797 = vpop.f32.mrf.mxu0
        %v1798 = vadd.f32 0.0, %v1797
        %1799 = vmatmul.bf16.gmra.mxu0 %v1526
        %v1800 = vpop.f32.mrf.mxu0
        %v1801 = vadd.f32 0.0, %v1800
        %v1802 = vpop.f32.mrf.mxu0
        %v1803 = vadd.f32 0.0, %v1802
        %1804 = vmatmul.bf16.gmra.mxu0 %v1528
        %v1805 = vpop.f32.mrf.mxu0
        %v1806 = vadd.f32 0.0, %v1805
        %v1807 = vpop.f32.mrf.mxu0
        %v1808 = vadd.f32 0.0, %v1807
        %1809 = vmatmul.bf16.gmra.mxu0 %v1530
        %v1810 = vpop.f32.mrf.mxu0
        %v1811 = vadd.f32 0.0, %v1810
        %v1812 = vpop.f32.mrf.mxu0
        %v1813 = vadd.f32 0.0, %v1812
        %1814 = vmatmul.bf16.gmra.mxu0 %v1532
        %v1815 = vpop.f32.mrf.mxu0
        %v1816 = vadd.f32 0.0, %v1815
        %v1817 = vpop.f32.mrf.mxu0
        %v1818 = vadd.f32 0.0, %v1817
        %1819 = vmatmul.bf16.gmra.mxu0 %v1534
        %v1820 = vpop.f32.mrf.mxu0
        %v1821 = vadd.f32 0.0, %v1820
        %v1822 = vpop.f32.mrf.mxu0
        %v1823 = vadd.f32 0.0, %v1822
        %1824 = vdwg.mxu0
        %1825 = vmatpush.bf16.msra.mxu0 %v1675
        %1826 = vmatpush.bf16.msra.mxu0 %v1673
        %1827 = vmatpush.bf16.msra.mxu0 %v1671
        %1828 = vmatpush.bf16.msra.mxu0 %v1669
        %1829 = vmatpush.bf16.msra.mxu0 %v1667
        %1830 = vmatpush.bf16.msra.mxu0 %v1665
        %1831 = vmatpush.bf16.msra.mxu0 %v1663
        %1832 = vmatpush.bf16.msra.mxu0 %v1661
        %1833 = vmatmul.bf16.gmra.mxu0 %v1525
        %v1834 = vpop.f32.mrf.mxu0
        %v1835 = vadd.f32 %v1796, %v1834
        %v1836 = vpop.f32.mrf.mxu0
        %v1837 = vadd.f32 %v1798, %v1836
        %1838 = vmatmul.bf16.gmra.mxu0 %v1527
        %v1839 = vpop.f32.mrf.mxu0
        %v1840 = vadd.f32 %v1801, %v1839
        %v1841 = vpop.f32.mrf.mxu0
        %v1842 = vadd.f32 %v1803, %v1841
        %1843 = vmatmul.bf16.gmra.mxu0 %v1529
        %v1844 = vpop.f32.mrf.mxu0
        %v1845 = vadd.f32 %v1806, %v1844
        %v1846 = vpop.f32.mrf.mxu0
        %v1847 = vadd.f32 %v1808, %v1846
        %1848 = vmatmul.bf16.gmra.mxu0 %v1531
        %v1849 = vpop.f32.mrf.mxu0
        %v1850 = vadd.f32 %v1811, %v1849
        %v1851 = vpop.f32.mrf.mxu0
        %v1852 = vadd.f32 %v1813, %v1851
        %1853 = vmatmul.bf16.gmra.mxu0 %v1533
        %v1854 = vpop.f32.mrf.mxu0
        %v1855 = vadd.f32 %v1816, %v1854
        %v1856 = vpop.f32.mrf.mxu0
        %v1857 = vadd.f32 %v1818, %v1856
        %1858 = vmatmul.bf16.gmra.mxu0 %v1535
        %v1859 = vpop.f32.mrf.mxu0
        %v1860 = vadd.f32 %v1821, %v1859
        %v1861 = vpop.f32.mrf.mxu0
        %v1862 = vadd.f32 %v1823, %v1861
        %1863 = vdwg.mxu0
        %v1864 = vadd.f32 %v1464, %v1757
        %v1865 = vadd.f32 %v1465, %v1835
        %v1866 = vadd.f32 %v1466, %v1759
        %v1867 = vadd.f32 %v1467, %v1837
        %v1868 = vadd.f32 %v1468, %v1762
        %v1869 = vadd.f32 %v1469, %v1840
        %v1870 = vadd.f32 %v1470, %v1764
        %v1871 = vadd.f32 %v1471, %v1842
        %v1872 = vadd.f32 %v1472, %v1767
        %v1873 = vadd.f32 %v1473, %v1845
        %v1874 = vadd.f32 %v1474, %v1769
        %v1875 = vadd.f32 %v1475, %v1847
        %v1876 = vadd.f32 %v1476, %v1772
        %v1877 = vadd.f32 %v1477, %v1850
        %v1878 = vadd.f32 %v1478, %v1774
        %v1879 = vadd.f32 %v1479, %v1852
        %v1880 = vadd.f32 %v1480, %v1777
        %v1881 = vadd.f32 %v1481, %v1855
        %v1882 = vadd.f32 %v1482, %v1779
        %v1883 = vadd.f32 %v1483, %v1857
        %v1884 = vadd.f32 %v1484, %v1782
        %v1885 = vadd.f32 %v1485, %v1860
        %v1886 = vadd.f32 %v1486, %v1784
        %v1887 = vadd.f32 %v1487, %v1862
        %1888 = vst [vmem:[#allocation3] sm:$0xff] %v1864
        %1889 = vst [vmem:[#allocation3 + $0x8] sm:$0xff] %v1865
        %1890 = vst [vmem:[#allocation3 + $0x10] sm:$0xff] %v1866
        %1891 = vst [vmem:[#allocation3 + $0x18] sm:$0xff] %v1867
        %1892 = vst [vmem:[#allocation3 + $0x20] sm:$0xff] %v1868
        %1893 = vst [vmem:[#allocation3 + $0x28] sm:$0xff] %v1869
        %1894 = vst [vmem:[#allocation3 + $0x30] sm:$0xff] %v1870
        %1895 = vst [vmem:[#allocation3 + $0x38] sm:$0xff] %v1871
        %1896 = vst [vmem:[#allocation3 + $0x40] sm:$0xff] %v1872
        %1897 = vst [vmem:[#allocation3 + $0x48] sm:$0xff] %v1873
        %1898 = vst [vmem:[#allocation3 + $0x50] sm:$0xff] %v1874
        %1899 = vst [vmem:[#allocation3 + $0x58] sm:$0xff] %v1875
        %1900 = vst [vmem:[#allocation3 + $0x60] sm:$0xff] %v1876
        %1901 = vst [vmem:[#allocation3 + $0x68] sm:$0xff] %v1877
        %1902 = vst [vmem:[#allocation3 + $0x70] sm:$0xff] %v1878
        %1903 = vst [vmem:[#allocation3 + $0x78] sm:$0xff] %v1879
        %1904 = vst [vmem:[#allocation3 + $0x80] sm:$0xff] %v1880
        %1905 = vst [vmem:[#allocation3 + $0x88] sm:$0xff] %v1881
        %1906 = vst [vmem:[#allocation3 + $0x90] sm:$0xff] %v1882
        %1907 = vst [vmem:[#allocation3 + $0x98] sm:$0xff] %v1883
        %1908 = vst [vmem:[#allocation3 + $0xa0] sm:$0xff] %v1884
        %1909 = vst [vmem:[#allocation3 + $0xa8] sm:$0xff] %v1885
        %1910 = vst [vmem:[#allocation3 + $0xb0] sm:$0xff] %v1886
        %1911 = vst [vmem:[#allocation3 + $0xb8] sm:$0xff] %v1887
        %v1912 = vld [vmem:[#allocation4] sm:$0xff]
        %v1913 = vld [vmem:[#allocation4 + $0x8] sm:$0xff]
        %v1914 = vld [vmem:[#allocation4 + $0x10] sm:$0xff]
        %v1915 = vld [vmem:[#allocation4 + $0x18] sm:$0xff]
        %v1916 = vld [vmem:[#allocation4 + $0x20] sm:$0xff]
        %v1917 = vld [vmem:[#allocation4 + $0x28] sm:$0xff]
        %v1918 = vld [vmem:[#allocation4 + $0x30] sm:$0xff]
        %v1919 = vld [vmem:[#allocation4 + $0x38] sm:$0xff]
        %v1920 = vld [vmem:[#allocation4 + $0x40] sm:$0xff]
        %v1921 = vld [vmem:[#allocation4 + $0x48] sm:$0xff]
        %v1922 = vld [vmem:[#allocation4 + $0x50] sm:$0xff]
        %v1923 = vld [vmem:[#allocation4 + $0x58] sm:$0xff]
        %v1924 = vld [vmem:[#allocation4 + $0x60] sm:$0xff]
        %v1925 = vld [vmem:[#allocation4 + $0x68] sm:$0xff]
        %v1926 = vld [vmem:[#allocation4 + $0x70] sm:$0xff]
        %v1927 = vld [vmem:[#allocation4 + $0x78] sm:$0xff]
        %v1928 = vld [vmem:[#allocation4 + $0x80] sm:$0xff]
        %v1929 = vld [vmem:[#allocation4 + $0x88] sm:$0xff]
        %v1930 = vld [vmem:[#allocation4 + $0x90] sm:$0xff]
        %v1931 = vld [vmem:[#allocation4 + $0x98] sm:$0xff]
        %v1932 = vld [vmem:[#allocation4 + $0xa0] sm:$0xff]
        %v1933 = vld [vmem:[#allocation4 + $0xa8] sm:$0xff]
        %v1934 = vld [vmem:[#allocation4 + $0xb0] sm:$0xff]
        %v1935 = vld [vmem:[#allocation4 + $0xb8] sm:$0xff]
        %1936 = vmatpush.bf16.msra.mxu0 %v998
        %1937 = vmatpush.bf16.msra.mxu0 %v996
        %1938 = vmatpush.bf16.msra.mxu0 %v994
        %1939 = vmatpush.bf16.msra.mxu0 %v992
        %1940 = vmatpush.bf16.msra.mxu0 %v990
        %1941 = vmatpush.bf16.msra.mxu0 %v988
        %1942 = vmatpush.bf16.msra.mxu0 %v986
        %1943 = vmatpush.bf16.msra.mxu0 %v984
        %1944 = vmatmul.bf16.gmra.mxu0 %v780
        %v1945 = vpop.f32.mrf.mxu0
        %v1946 = vadd.f32 0.0, %v1945
        %v1947 = vpop.f32.mrf.mxu0
        %v1948 = vadd.f32 0.0, %v1947
        %1949 = vmatmul.bf16.gmra.mxu0 %v782
        %v1950 = vpop.f32.mrf.mxu0
        %v1951 = vadd.f32 0.0, %v1950
        %v1952 = vpop.f32.mrf.mxu0
        %v1953 = vadd.f32 0.0, %v1952
        %1954 = vmatmul.bf16.gmra.mxu0 %v784
        %v1955 = vpop.f32.mrf.mxu0
        %v1956 = vadd.f32 0.0, %v1955
        %v1957 = vpop.f32.mrf.mxu0
        %v1958 = vadd.f32 0.0, %v1957
        %1959 = vmatmul.bf16.gmra.mxu0 %v786
        %v1960 = vpop.f32.mrf.mxu0
        %v1961 = vadd.f32 0.0, %v1960
        %v1962 = vpop.f32.mrf.mxu0
        %v1963 = vadd.f32 0.0, %v1962
        %1964 = vmatmul.bf16.gmra.mxu0 %v788
        %v1965 = vpop.f32.mrf.mxu0
        %v1966 = vadd.f32 0.0, %v1965
        %v1967 = vpop.f32.mrf.mxu0
        %v1968 = vadd.f32 0.0, %v1967
        %1969 = vmatmul.bf16.gmra.mxu0 %v790
        %v1970 = vpop.f32.mrf.mxu0
        %v1971 = vadd.f32 0.0, %v1970
        %v1972 = vpop.f32.mrf.mxu0
        %v1973 = vadd.f32 0.0, %v1972
        %1974 = vdwg.mxu0
        %1975 = vmatpush.bf16.msra.mxu0 %v1014
        %1976 = vmatpush.bf16.msra.mxu0 %v1012
        %1977 = vmatpush.bf16.msra.mxu0 %v1010
        %1978 = vmatpush.bf16.msra.mxu0 %v1008
        %1979 = vmatpush.bf16.msra.mxu0 %v1006
        %1980 = vmatpush.bf16.msra.mxu0 %v1004
        %1981 = vmatpush.bf16.msra.mxu0 %v1002
        %1982 = vmatpush.bf16.msra.mxu0 %v1000
        %1983 = vmatmul.bf16.gmra.mxu0 %v781
        %v1984 = vpop.f32.mrf.mxu0
        %v1985 = vadd.f32 %v1946, %v1984
        %v1986 = vpop.f32.mrf.mxu0
        %v1987 = vadd.f32 %v1948, %v1986
        %1988 = vmatmul.bf16.gmra.mxu0 %v783
        %v1989 = vpop.f32.mrf.mxu0
        %v1990 = vadd.f32 %v1951, %v1989
        %v1991 = vpop.f32.mrf.mxu0
        %v1992 = vadd.f32 %v1953, %v1991
        %1993 = vmatmul.bf16.gmra.mxu0 %v785
        %v1994 = vpop.f32.mrf.mxu0
        %v1995 = vadd.f32 %v1956, %v1994
        %v1996 = vpop.f32.mrf.mxu0
        %v1997 = vadd.f32 %v1958, %v1996
        %1998 = vmatmul.bf16.gmra.mxu0 %v787
        %v1999 = vpop.f32.mrf.mxu0
        %v2000 = vadd.f32 %v1961, %v1999
        %v2001 = vpop.f32.mrf.mxu0
        %v2002 = vadd.f32 %v1963, %v2001
        %2003 = vmatmul.bf16.gmra.mxu0 %v789
        %v2004 = vpop.f32.mrf.mxu0
        %v2005 = vadd.f32 %v1966, %v2004
        %v2006 = vpop.f32.mrf.mxu0
        %v2007 = vadd.f32 %v1968, %v2006
        %2008 = vmatmul.bf16.gmra.mxu0 %v791
        %v2009 = vpop.f32.mrf.mxu0
        %v2010 = vadd.f32 %v1971, %v2009
        %v2011 = vpop.f32.mrf.mxu0
        %v2012 = vadd.f32 %v1973, %v2011
        %2013 = vdwg.mxu0
        %2014 = vmatpush.bf16.msra.mxu0 %v999
        %2015 = vmatpush.bf16.msra.mxu0 %v997
        %2016 = vmatpush.bf16.msra.mxu0 %v995
        %2017 = vmatpush.bf16.msra.mxu0 %v993
        %2018 = vmatpush.bf16.msra.mxu0 %v991
        %2019 = vmatpush.bf16.msra.mxu0 %v989
        %2020 = vmatpush.bf16.msra.mxu0 %v987
        %2021 = vmatpush.bf16.msra.mxu0 %v985
        %2022 = vmatmul.bf16.gmra.mxu0 %v780
        %v2023 = vpop.f32.mrf.mxu0
        %v2024 = vadd.f32 0.0, %v2023
        %v2025 = vpop.f32.mrf.mxu0
        %v2026 = vadd.f32 0.0, %v2025
        %2027 = vmatmul.bf16.gmra.mxu0 %v782
        %v2028 = vpop.f32.mrf.mxu0
        %v2029 = vadd.f32 0.0, %v2028
        %v2030 = vpop.f32.mrf.mxu0
        %v2031 = vadd.f32 0.0, %v2030
        %2032 = vmatmul.bf16.gmra.mxu0 %v784
        %v2033 = vpop.f32.mrf.mxu0
        %v2034 = vadd.f32 0.0, %v2033
        %v2035 = vpop.f32.mrf.mxu0
        %v2036 = vadd.f32 0.0, %v2035
        %2037 = vmatmul.bf16.gmra.mxu0 %v786
        %v2038 = vpop.f32.mrf.mxu0
        %v2039 = vadd.f32 0.0, %v2038
        %v2040 = vpop.f32.mrf.mxu0
        %v2041 = vadd.f32 0.0, %v2040
        %2042 = vmatmul.bf16.gmra.mxu0 %v788
        %v2043 = vpop.f32.mrf.mxu0
        %v2044 = vadd.f32 0.0, %v2043
        %v2045 = vpop.f32.mrf.mxu0
        %v2046 = vadd.f32 0.0, %v2045
        %2047 = vmatmul.bf16.gmra.mxu0 %v790
        %v2048 = vpop.f32.mrf.mxu0
        %v2049 = vadd.f32 0.0, %v2048
        %v2050 = vpop.f32.mrf.mxu0
        %v2051 = vadd.f32 0.0, %v2050
        %2052 = vdwg.mxu0
        %2053 = vmatpush.bf16.msra.mxu0 %v1015
        %2054 = vmatpush.bf16.msra.mxu0 %v1013
        %2055 = vmatpush.bf16.msra.mxu0 %v1011
        %2056 = vmatpush.bf16.msra.mxu0 %v1009
        %2057 = vmatpush.bf16.msra.mxu0 %v1007
        %2058 = vmatpush.bf16.msra.mxu0 %v1005
        %2059 = vmatpush.bf16.msra.mxu0 %v1003
        %2060 = vmatpush.bf16.msra.mxu0 %v1001
        %2061 = vmatmul.bf16.gmra.mxu0 %v781
        %v2062 = vpop.f32.mrf.mxu0
        %v2063 = vadd.f32 %v2024, %v2062
        %v2064 = vpop.f32.mrf.mxu0
        %v2065 = vadd.f32 %v2026, %v2064
        %2066 = vmatmul.bf16.gmra.mxu0 %v783
        %v2067 = vpop.f32.mrf.mxu0
        %v2068 = vadd.f32 %v2029, %v2067
        %v2069 = vpop.f32.mrf.mxu0
        %v2070 = vadd.f32 %v2031, %v2069
        %2071 = vmatmul.bf16.gmra.mxu0 %v785
        %v2072 = vpop.f32.mrf.mxu0
        %v2073 = vadd.f32 %v2034, %v2072
        %v2074 = vpop.f32.mrf.mxu0
        %v2075 = vadd.f32 %v2036, %v2074
        %2076 = vmatmul.bf16.gmra.mxu0 %v787
        %v2077 = vpop.f32.mrf.mxu0
        %v2078 = vadd.f32 %v2039, %v2077
        %v2079 = vpop.f32.mrf.mxu0
        %v2080 = vadd.f32 %v2041, %v2079
        %2081 = vmatmul.bf16.gmra.mxu0 %v789
        %v2082 = vpop.f32.mrf.mxu0
        %v2083 = vadd.f32 %v2044, %v2082
        %v2084 = vpop.f32.mrf.mxu0
        %v2085 = vadd.f32 %v2046, %v2084
        %2086 = vmatmul.bf16.gmra.mxu0 %v791
        %v2087 = vpop.f32.mrf.mxu0
        %v2088 = vadd.f32 %v2049, %v2087
        %v2089 = vpop.f32.mrf.mxu0
        %v2090 = vadd.f32 %v2051, %v2089
        %2091 = vdwg.mxu0
        %v2092 = vadd.f32 %v1912, %v1985
        %v2093 = vadd.f32 %v1913, %v2063
        %v2094 = vadd.f32 %v1914, %v1987
        %v2095 = vadd.f32 %v1915, %v2065
        %v2096 = vadd.f32 %v1916, %v1990
        %v2097 = vadd.f32 %v1917, %v2068
        %v2098 = vadd.f32 %v1918, %v1992
        %v2099 = vadd.f32 %v1919, %v2070
        %v2100 = vadd.f32 %v1920, %v1995
        %v2101 = vadd.f32 %v1921, %v2073
        %v2102 = vadd.f32 %v1922, %v1997
        %v2103 = vadd.f32 %v1923, %v2075
        %v2104 = vadd.f32 %v1924, %v2000
        %v2105 = vadd.f32 %v1925, %v2078
        %v2106 = vadd.f32 %v1926, %v2002
        %v2107 = vadd.f32 %v1927, %v2080
        %v2108 = vadd.f32 %v1928, %v2005
        %v2109 = vadd.f32 %v1929, %v2083
        %v2110 = vadd.f32 %v1930, %v2007
        %v2111 = vadd.f32 %v1931, %v2085
        %v2112 = vadd.f32 %v1932, %v2010
        %v2113 = vadd.f32 %v1933, %v2088
        %v2114 = vadd.f32 %v1934, %v2012
        %v2115 = vadd.f32 %v1935, %v2090
        %2116 = vst [vmem:[#allocation4] sm:$0xff] %v2092
        %2117 = vst [vmem:[#allocation4 + $0x8] sm:$0xff] %v2093
        %2118 = vst [vmem:[#allocation4 + $0x10] sm:$0xff] %v2094
        %2119 = vst [vmem:[#allocation4 + $0x18] sm:$0xff] %v2095
        %2120 = vst [vmem:[#allocation4 + $0x20] sm:$0xff] %v2096
        %2121 = vst [vmem:[#allocation4 + $0x28] sm:$0xff] %v2097
        %2122 = vst [vmem:[#allocation4 + $0x30] sm:$0xff] %v2098
        %2123 = vst [vmem:[#allocation4 + $0x38] sm:$0xff] %v2099
        %2124 = vst [vmem:[#allocation4 + $0x40] sm:$0xff] %v2100
        %2125 = vst [vmem:[#allocation4 + $0x48] sm:$0xff] %v2101
        %2126 = vst [vmem:[#allocation4 + $0x50] sm:$0xff] %v2102
        %2127 = vst [vmem:[#allocation4 + $0x58] sm:$0xff] %v2103
        %2128 = vst [vmem:[#allocation4 + $0x60] sm:$0xff] %v2104
        %2129 = vst [vmem:[#allocation4 + $0x68] sm:$0xff] %v2105
        %2130 = vst [vmem:[#allocation4 + $0x70] sm:$0xff] %v2106
        %2131 = vst [vmem:[#allocation4 + $0x78] sm:$0xff] %v2107
        %2132 = vst [vmem:[#allocation4 + $0x80] sm:$0xff] %v2108
        %2133 = vst [vmem:[#allocation4 + $0x88] sm:$0xff] %v2109
        %2134 = vst [vmem:[#allocation4 + $0x90] sm:$0xff] %v2110
        %2135 = vst [vmem:[#allocation4 + $0x98] sm:$0xff] %v2111
        %2136 = vst [vmem:[#allocation4 + $0xa0] sm:$0xff] %v2112
        %2137 = vst [vmem:[#allocation4 + $0xa8] sm:$0xff] %v2113
        %2138 = vst [vmem:[#allocation4 + $0xb0] sm:$0xff] %v2114
        %2139 = vst [vmem:[#allocation4 + $0xb8] sm:$0xff] %v2115
        %p2140 = scmp.eq.s32.totalorder %s41, 1
        // Predicated region
        $region69: #{tpu_custom_call.1} parent=43 // pred_check
          %p2141 = pneg %p2140
        $region70: #{tpu_custom_call.1} parent=43 // pred_check_branch
          %2143 = sbr.rel (%p2141) target = $region72
        $region71: #{tpu_custom_call.1} parent=43 // pred_region
          %v2144 = vld [vmem:[#allocation2] sm:$0xff]
          %v2145 = vld [vmem:[#allocation2 + $0x8] sm:$0xff]
          %v2146 = vld [vmem:[#allocation2 + $0x10] sm:$0xff]
          %v2147 = vld [vmem:[#allocation2 + $0x18] sm:$0xff]
          %v2148 = vld [vmem:[#allocation2 + $0x20] sm:$0xff]
          %v2149 = vld [vmem:[#allocation2 + $0x28] sm:$0xff]
          %v2150 = vld [vmem:[#allocation2 + $0x30] sm:$0xff]
          %v2151 = vld [vmem:[#allocation2 + $0x38] sm:$0xff]
          %v2152 = vld [vmem:[#allocation2 + $0x40] sm:$0xff]
          %v2153 = vld [vmem:[#allocation2 + $0x48] sm:$0xff]
          %v2154 = vld [vmem:[#allocation2 + $0x50] sm:$0xff]
          %v2155 = vld [vmem:[#allocation2 + $0x58] sm:$0xff]
          %v2156 = vld [vmem:[#allocation2 + $0x60] sm:$0xff]
          %v2157 = vld [vmem:[#allocation2 + $0x68] sm:$0xff]
          %v2158 = vld [vmem:[#allocation2 + $0x70] sm:$0xff]
          %v2159 = vld [vmem:[#allocation2 + $0x78] sm:$0xff]
          %v2160 = vld [vmem:[#allocation2 + $0x80] sm:$0xff]
          %v2161 = vld [vmem:[#allocation2 + $0x88] sm:$0xff]
          %v2162 = vld [vmem:[#allocation2 + $0x90] sm:$0xff]
          %v2163 = vld [vmem:[#allocation2 + $0x98] sm:$0xff]
          %v2164 = vld [vmem:[#allocation2 + $0xa0] sm:$0xff]
          %v2165 = vld [vmem:[#allocation2 + $0xa8] sm:$0xff]
          %v2166 = vld [vmem:[#allocation2 + $0xb0] sm:$0xff]
          %v2167 = vld [vmem:[#allocation2 + $0xb8] sm:$0xff]
          %v2168 = vld [vmem:[#allocation3] sm:$0xff]
          %v2169 = vld [vmem:[#allocation3 + $0x8] sm:$0xff]
          %v2170 = vld [vmem:[#allocation3 + $0x10] sm:$0xff]
          %v2171 = vld [vmem:[#allocation3 + $0x18] sm:$0xff]
          %v2172 = vld [vmem:[#allocation3 + $0x20] sm:$0xff]
          %v2173 = vld [vmem:[#allocation3 + $0x28] sm:$0xff]
          %v2174 = vld [vmem:[#allocation3 + $0x30] sm:$0xff]
          %v2175 = vld [vmem:[#allocation3 + $0x38] sm:$0xff]
          %v2176 = vld [vmem:[#allocation3 + $0x40] sm:$0xff]
          %v2177 = vld [vmem:[#allocation3 + $0x48] sm:$0xff]
          %v2178 = vld [vmem:[#allocation3 + $0x50] sm:$0xff]
          %v2179 = vld [vmem:[#allocation3 + $0x58] sm:$0xff]
          %v2180 = vld [vmem:[#allocation3 + $0x60] sm:$0xff]
          %v2181 = vld [vmem:[#allocation3 + $0x68] sm:$0xff]
          %v2182 = vld [vmem:[#allocation3 + $0x70] sm:$0xff]
          %v2183 = vld [vmem:[#allocation3 + $0x78] sm:$0xff]
          %v2184 = vld [vmem:[#allocation3 + $0x80] sm:$0xff]
          %v2185 = vld [vmem:[#allocation3 + $0x88] sm:$0xff]
          %v2186 = vld [vmem:[#allocation3 + $0x90] sm:$0xff]
          %v2187 = vld [vmem:[#allocation3 + $0x98] sm:$0xff]
          %v2188 = vld [vmem:[#allocation3 + $0xa0] sm:$0xff]
          %v2189 = vld [vmem:[#allocation3 + $0xa8] sm:$0xff]
          %v2190 = vld [vmem:[#allocation3 + $0xb0] sm:$0xff]
          %v2191 = vld [vmem:[#allocation3 + $0xb8] sm:$0xff]
          %v2192 = vsub.f32 %v2144, %v2168
          %v2193 = vsub.f32 %v2145, %v2169
          %v2194 = vsub.f32 %v2146, %v2170
          %v2195 = vsub.f32 %v2147, %v2171
          %v2196 = vsub.f32 %v2148, %v2172
          %v2197 = vsub.f32 %v2149, %v2173
          %v2198 = vsub.f32 %v2150, %v2174
          %v2199 = vsub.f32 %v2151, %v2175
          %v2200 = vsub.f32 %v2152, %v2176
          %v2201 = vsub.f32 %v2153, %v2177
          %v2202 = vsub.f32 %v2154, %v2178
          %v2203 = vsub.f32 %v2155, %v2179
          %v2204 = vsub.f32 %v2156, %v2180
          %v2205 = vsub.f32 %v2157, %v2181
          %v2206 = vsub.f32 %v2158, %v2182
          %v2207 = vsub.f32 %v2159, %v2183
          %v2208 = vsub.f32 %v2160, %v2184
          %v2209 = vsub.f32 %v2161, %v2185
          %v2210 = vsub.f32 %v2162, %v2186
          %v2211 = vsub.f32 %v2163, %v2187
          %v2212 = vsub.f32 %v2164, %v2188
          %v2213 = vsub.f32 %v2165, %v2189
          %v2214 = vsub.f32 %v2166, %v2190
          %v2215 = vsub.f32 %v2167, %v2191
          %v2216 = vld [vmem:[%s465] sm:$0x3]
          %v2218 = vperm.slane %v2216, 0
          %v2219 = vperm.slane %v2216, 1
          %v2222 = vadd.f32 %v2192, %v2218
          %v2223 = vadd.f32 %v2193, %v2219
          %v2224 = vadd.f32 %v2194, %v2218
          %v2225 = vadd.f32 %v2195, %v2219
          %v2226 = vadd.f32 %v2196, %v2218
          %v2227 = vadd.f32 %v2197, %v2219
          %v2228 = vadd.f32 %v2198, %v2218
          %v2229 = vadd.f32 %v2199, %v2219
          %v2230 = vadd.f32 %v2200, %v2218
          %v2231 = vadd.f32 %v2201, %v2219
          %v2232 = vadd.f32 %v2202, %v2218
          %v2233 = vadd.f32 %v2203, %v2219
          %v2234 = vadd.f32 %v2204, %v2218
          %v2235 = vadd.f32 %v2205, %v2219
          %v2236 = vadd.f32 %v2206, %v2218
          %v2237 = vadd.f32 %v2207, %v2219
          %v2238 = vadd.f32 %v2208, %v2218
          %v2239 = vadd.f32 %v2209, %v2219
          %v2240 = vadd.f32 %v2210, %v2218
          %v2241 = vadd.f32 %v2211, %v2219
          %v2242 = vadd.f32 %v2212, %v2218
          %v2243 = vadd.f32 %v2213, %v2219
          %v2244 = vadd.f32 %v2214, %v2218
          %v2245 = vadd.f32 %v2215, %v2219
          %2246 = vst [vmem:[%s518] sm:$0xff] %v2222
          %2247 = vst [vmem:[%s518 + $0x8] sm:$0xff] %v2223
          %2248 = vst [vmem:[%s518 + $0x10] sm:$0xff] %v2224
          %2249 = vst [vmem:[%s518 + $0x18] sm:$0xff] %v2225
          %2250 = vst [vmem:[%s518 + $0x20] sm:$0xff] %v2226
          %2251 = vst [vmem:[%s518 + $0x28] sm:$0xff] %v2227
          %2252 = vst [vmem:[%s518 + $0x30] sm:$0xff] %v2228
          %2253 = vst [vmem:[%s518 + $0x38] sm:$0xff] %v2229
          %2254 = vst [vmem:[%s518 + $0x40] sm:$0xff] %v2230
          %2255 = vst [vmem:[%s518 + $0x48] sm:$0xff] %v2231
          %2256 = vst [vmem:[%s518 + $0x50] sm:$0xff] %v2232
          %2257 = vst [vmem:[%s518 + $0x58] sm:$0xff] %v2233
          %2258 = vst [vmem:[%s518 + $0x60] sm:$0xff] %v2234
          %2259 = vst [vmem:[%s518 + $0x68] sm:$0xff] %v2235
          %2260 = vst [vmem:[%s518 + $0x70] sm:$0xff] %v2236
          %2261 = vst [vmem:[%s518 + $0x78] sm:$0xff] %v2237
          %2262 = vst [vmem:[%s518 + $0x80] sm:$0xff] %v2238
          %2263 = vst [vmem:[%s518 + $0x88] sm:$0xff] %v2239
          %2264 = vst [vmem:[%s518 + $0x90] sm:$0xff] %v2240
          %2265 = vst [vmem:[%s518 + $0x98] sm:$0xff] %v2241
          %2266 = vst [vmem:[%s518 + $0xa0] sm:$0xff] %v2242
          %2267 = vst [vmem:[%s518 + $0xa8] sm:$0xff] %v2243
          %2268 = vst [vmem:[%s518 + $0xb0] sm:$0xff] %v2244
          %2269 = vst [vmem:[%s518 + $0xb8] sm:$0xff] %v2245
          %v2270 = vld [vmem:[#allocation4] sm:$0xff]
          %v2271 = vld [vmem:[#allocation4 + $0x8] sm:$0xff]
          %v2272 = vld [vmem:[#allocation4 + $0x10] sm:$0xff]
          %v2273 = vld [vmem:[#allocation4 + $0x18] sm:$0xff]
          %v2274 = vld [vmem:[#allocation4 + $0x20] sm:$0xff]
          %v2275 = vld [vmem:[#allocation4 + $0x28] sm:$0xff]
          %v2276 = vld [vmem:[#allocation4 + $0x30] sm:$0xff]
          %v2277 = vld [vmem:[#allocation4 + $0x38] sm:$0xff]
          %v2278 = vld [vmem:[#allocation4 + $0x40] sm:$0xff]
          %v2279 = vld [vmem:[#allocation4 + $0x48] sm:$0xff]
          %v2280 = vld [vmem:[#allocation4 + $0x50] sm:$0xff]
          %v2281 = vld [vmem:[#allocation4 + $0x58] sm:$0xff]
          %v2282 = vld [vmem:[#allocation4 + $0x60] sm:$0xff]
          %v2283 = vld [vmem:[#allocation4 + $0x68] sm:$0xff]
          %v2284 = vld [vmem:[#allocation4 + $0x70] sm:$0xff]
          %v2285 = vld [vmem:[#allocation4 + $0x78] sm:$0xff]
          %v2286 = vld [vmem:[#allocation4 + $0x80] sm:$0xff]
          %v2287 = vld [vmem:[#allocation4 + $0x88] sm:$0xff]
          %v2288 = vld [vmem:[#allocation4 + $0x90] sm:$0xff]
          %v2289 = vld [vmem:[#allocation4 + $0x98] sm:$0xff]
          %v2290 = vld [vmem:[#allocation4 + $0xa0] sm:$0xff]
          %v2291 = vld [vmem:[#allocation4 + $0xa8] sm:$0xff]
          %v2292 = vld [vmem:[#allocation4 + $0xb0] sm:$0xff]
          %v2293 = vld [vmem:[#allocation4 + $0xb8] sm:$0xff]
          %v2294 = vsub.f32 %v2270, %v2144
          %v2295 = vsub.f32 %v2271, %v2145
          %v2296 = vsub.f32 %v2272, %v2146
          %v2297 = vsub.f32 %v2273, %v2147
          %v2298 = vsub.f32 %v2274, %v2148
          %v2299 = vsub.f32 %v2275, %v2149
          %v2300 = vsub.f32 %v2276, %v2150
          %v2301 = vsub.f32 %v2277, %v2151
          %v2302 = vsub.f32 %v2278, %v2152
          %v2303 = vsub.f32 %v2279, %v2153
          %v2304 = vsub.f32 %v2280, %v2154
          %v2305 = vsub.f32 %v2281, %v2155
          %v2306 = vsub.f32 %v2282, %v2156
          %v2307 = vsub.f32 %v2283, %v2157
          %v2308 = vsub.f32 %v2284, %v2158
          %v2309 = vsub.f32 %v2285, %v2159
          %v2310 = vsub.f32 %v2286, %v2160
          %v2311 = vsub.f32 %v2287, %v2161
          %v2312 = vsub.f32 %v2288, %v2162
          %v2313 = vsub.f32 %v2289, %v2163
          %v2314 = vsub.f32 %v2290, %v2164
          %v2315 = vsub.f32 %v2291, %v2165
          %v2316 = vsub.f32 %v2292, %v2166
          %v2317 = vsub.f32 %v2293, %v2167
          %v2318 = vsub.f32 %v2294, %v2168
          %v2319 = vsub.f32 %v2295, %v2169
          %v2320 = vsub.f32 %v2296, %v2170
          %v2321 = vsub.f32 %v2297, %v2171
          %v2322 = vsub.f32 %v2298, %v2172
          %v2323 = vsub.f32 %v2299, %v2173
          %v2324 = vsub.f32 %v2300, %v2174
          %v2325 = vsub.f32 %v2301, %v2175
          %v2326 = vsub.f32 %v2302, %v2176
          %v2327 = vsub.f32 %v2303, %v2177
          %v2328 = vsub.f32 %v2304, %v2178
          %v2329 = vsub.f32 %v2305, %v2179
          %v2330 = vsub.f32 %v2306, %v2180
          %v2331 = vsub.f32 %v2307, %v2181
          %v2332 = vsub.f32 %v2308, %v2182
          %v2333 = vsub.f32 %v2309, %v2183
          %v2334 = vsub.f32 %v2310, %v2184
          %v2335 = vsub.f32 %v2311, %v2185
          %v2336 = vsub.f32 %v2312, %v2186
          %v2337 = vsub.f32 %v2313, %v2187
          %v2338 = vsub.f32 %v2314, %v2188
          %v2339 = vsub.f32 %v2315, %v2189
          %v2340 = vsub.f32 %v2316, %v2190
          %v2341 = vsub.f32 %v2317, %v2191
          %v2342 = vld [vmem:[%s538] sm:$0x3]
          %v2344 = vperm.slane %v2342, 0
          %v2345 = vperm.slane %v2342, 1
          %v2348 = vadd.f32 %v2318, %v2344
          %v2349 = vadd.f32 %v2319, %v2345
          %v2350 = vadd.f32 %v2320, %v2344
          %v2351 = vadd.f32 %v2321, %v2345
          %v2352 = vadd.f32 %v2322, %v2344
          %v2353 = vadd.f32 %v2323, %v2345
          %v2354 = vadd.f32 %v2324, %v2344
          %v2355 = vadd.f32 %v2325, %v2345
          %v2356 = vadd.f32 %v2326, %v2344
          %v2357 = vadd.f32 %v2327, %v2345
          %v2358 = vadd.f32 %v2328, %v2344
          %v2359 = vadd.f32 %v2329, %v2345
          %v2360 = vadd.f32 %v2330, %v2344
          %v2361 = vadd.f32 %v2331, %v2345
          %v2362 = vadd.f32 %v2332, %v2344
          %v2363 = vadd.f32 %v2333, %v2345
          %v2364 = vadd.f32 %v2334, %v2344
          %v2365 = vadd.f32 %v2335, %v2345
          %v2366 = vadd.f32 %v2336, %v2344
          %v2367 = vadd.f32 %v2337, %v2345
          %v2368 = vadd.f32 %v2338, %v2344
          %v2369 = vadd.f32 %v2339, %v2345
          %v2370 = vadd.f32 %v2340, %v2344
          %v2371 = vadd.f32 %v2341, %v2345
          %2372 = vst [vmem:[%s525] sm:$0xff] %v2348
          %2373 = vst [vmem:[%s525 + $0x8] sm:$0xff] %v2349
          %2374 = vst [vmem:[%s525 + $0x10] sm:$0xff] %v2350
          %2375 = vst [vmem:[%s525 + $0x18] sm:$0xff] %v2351
          %2376 = vst [vmem:[%s525 + $0x20] sm:$0xff] %v2352
          %2377 = vst [vmem:[%s525 + $0x28] sm:$0xff] %v2353
          %2378 = vst [vmem:[%s525 + $0x30] sm:$0xff] %v2354
          %2379 = vst [vmem:[%s525 + $0x38] sm:$0xff] %v2355
          %2380 = vst [vmem:[%s525 + $0x40] sm:$0xff] %v2356
          %2381 = vst [vmem:[%s525 + $0x48] sm:$0xff] %v2357
          %2382 = vst [vmem:[%s525 + $0x50] sm:$0xff] %v2358
          %2383 = vst [vmem:[%s525 + $0x58] sm:$0xff] %v2359
          %2384 = vst [vmem:[%s525 + $0x60] sm:$0xff] %v2360
          %2385 = vst [vmem:[%s525 + $0x68] sm:$0xff] %v2361
          %2386 = vst [vmem:[%s525 + $0x70] sm:$0xff] %v2362
          %2387 = vst [vmem:[%s525 + $0x78] sm:$0xff] %v2363
          %2388 = vst [vmem:[%s525 + $0x80] sm:$0xff] %v2364
          %2389 = vst [vmem:[%s525 + $0x88] sm:$0xff] %v2365
          %2390 = vst [vmem:[%s525 + $0x90] sm:$0xff] %v2366
          %2391 = vst [vmem:[%s525 + $0x98] sm:$0xff] %v2367
          %2392 = vst [vmem:[%s525 + $0xa0] sm:$0xff] %v2368
          %2393 = vst [vmem:[%s525 + $0xa8] sm:$0xff] %v2369
          %2394 = vst [vmem:[%s525 + $0xb0] sm:$0xff] %v2370
          %2395 = vst [vmem:[%s525 + $0xb8] sm:$0xff] %v2371
        $region72: #{tpu_custom_call.1} parent=43 // pred_fallthru
          _
        %s2396 = sand.u32 %s227, 1
        %s2397 = scalar_lea.sflag [#allocation7], %s2396
        %s2398 = sand.u32 %s227, 1
        %s2399 = smul.addr %s2398, 192
        %s2400 = scalar_lea.vmem [#allocation14], %s2399
        %s2401 = sand.u32 %s255, 1
        %s2402 = scalar_lea.sflag [#allocation16], %s2401
        %s2403 = sand.u32 %s255, 1
        %s2404 = smul.addr %s2403, 192
        %s2405 = scalar_lea.vmem [#allocation15], %s2404
        // Predicated region
        $region73: #{tpu_custom_call.1} parent=43 // pred_check
          %p2406 = pneg %p237
        $region74: #{tpu_custom_call.1} parent=43 // pred_check_branch
          %2408 = sbr.rel (%p2406) target = $region76
        $region75: #{tpu_custom_call.1} parent=43 // pred_region
          %s2409 = smul.u32 12, %s39
          %s2410 = smul.u32 2, %s40
          %2412 = vsyncadd %s2397, 0
          %s2413 = smul.addr %s2409, 4
          %s2414 = sadd.s32 %s2410, %s2413
          %s2415 = smul.addr %s2414, 8
          %s2416 = scalar_lea.hbm %s6, %s2415
          %s2417 = sshll.u32 %s2400, 4
          %s2418 = int_to_ptr.vmem [resolvable:$true] %s2417
          %s2419 = sshll.u32 %s2416, 4
          %s2420 = int_to_ptr.hbm [resolvable:$true] %s2419
          %2425 = dma.vmem_to_hbm [thread:$0]  %s2418, 3072, %s2420, %s2397, 256, 512, 16
        $region76: #{tpu_custom_call.1} parent=43 // pred_fallthru
          _
        // Predicated region
        $region77: #{tpu_custom_call.1} parent=43 // pred_check
          %p2426 = pneg %p265
        $region78: #{tpu_custom_call.1} parent=43 // pred_check_branch
          %2428 = sbr.rel (%p2426) target = $region80
        $region79: #{tpu_custom_call.1} parent=43 // pred_region
          %s2429 = smul.u32 12, %s39
          %s2430 = smul.u32 2, %s40
          %2432 = vsyncadd %s2402, 0
          %s2433 = smul.addr %s2429, 4
          %s2434 = sadd.s32 %s2430, %s2433
          %s2435 = smul.addr %s2434, 8
          %s2436 = scalar_lea.hbm %s7, %s2435
          %s2437 = sshll.u32 %s2405, 4
          %s2438 = int_to_ptr.vmem [resolvable:$true] %s2437
          %s2439 = sshll.u32 %s2436, 4
          %s2440 = int_to_ptr.hbm [resolvable:$true] %s2439
          %2445 = dma.vmem_to_hbm [thread:$0]  %s2438, 3072, %s2440, %s2402, 256, 512, 16
        $region80: #{tpu_custom_call.1} parent=43 // pred_fallthru
          _
      $region44: #{tpu_custom_call.1} parent=5 // pred_fallthru
        _
      %p2446 = scmp.le.s32.totalorder 2, %s29
      // Predicated region
      $region81: #{tpu_custom_call.1} parent=5 // pred_check
        %p2447 = pneg %p2446
      $region82: #{tpu_custom_call.1} parent=5 // pred_check_branch
        %2449 = sbr.rel (%p2447) target = $region84
      $region83: #{tpu_custom_call.1} parent=5 // pred_region
        %s2450 = ssub.s32 %s29, 2
        // Predicated region
        $region85: #{tpu_custom_call.1} parent=83 // pred_check
          %p2451 = pneg %p243
        $region86: #{tpu_custom_call.1} parent=83 // pred_check_branch
          %2453 = sbr.rel (%p2451) target = $region88
        $region87: #{tpu_custom_call.1} parent=83 // pred_region
          %s2454 = sand.u32 %s228, 1
          %s2455 = scalar_lea.sflag [#allocation7], %s2454
          %s2456 = sand.u32 %s228, 1
          %s2457 = smul.addr %s2456, 192
          %s2458 = scalar_lea.vmem [#allocation14], %s2457
          %2460 = dma.done %s2455, 3072
        $region88: #{tpu_custom_call.1} parent=83 // pred_fallthru
          _
        // Predicated region
        $region89: #{tpu_custom_call.1} parent=83 // pred_check
          %p2461 = pneg %p271
        $region90: #{tpu_custom_call.1} parent=83 // pred_check_branch
          %2463 = sbr.rel (%p2461) target = $region92
        $region91: #{tpu_custom_call.1} parent=83 // pred_region
          %s2464 = sand.u32 %s256, 1
          %s2465 = scalar_lea.sflag [#allocation16], %s2464
          %s2466 = sand.u32 %s256, 1
          %s2467 = smul.addr %s2466, 192
          %s2468 = scalar_lea.vmem [#allocation15], %s2467
          %2470 = dma.done %s2465, 3072
        $region92: #{tpu_custom_call.1} parent=83 // pred_fallthru
          _
      $region84: #{tpu_custom_call.1} parent=5 // pred_fallthru
        _
    $region6: #{tpu_custom_call.1} parent=1 // loop_footer
      %s33 = sadd.s32 1, %s29
    $region7: #{tpu_custom_call.1} parent=1 // loop_footer_branch
      %28 = sbr.rel target = $region3
    $region8: #{tpu_custom_call.1} parent=1 // loop_exit
      _
    %2471 = vsyncpa [#allocation6], 1
    %s2472 = scalar_lea.sflag [#allocation6], 1
    %2473 = vsyncpa %s2472, 1
    %2474 = vsyncpa [#allocation9], 1
    %s2475 = scalar_lea.sflag [#allocation9], 1
    %2476 = vsyncpa %s2475, 1
    %2477 = vsyncpa [#allocation12], 1
    %s2478 = scalar_lea.sflag [#allocation12], 1
    %2479 = vsyncpa %s2478, 1
    %2480 = vsyncpa [#allocation7], 1
    %s2481 = scalar_lea.sflag [#allocation7], 1
    %2482 = vsyncpa %s2481, 1
    %2483 = vsyncpa [#allocation16], 1
    %s2484 = scalar_lea.sflag [#allocation16], 1
    %2485 = vsyncpa %s2484, 1

</llo_original>
